<compile_context>
chip_gen: v7x
topology: tpu7x:2x2x1
jax: 0.10.0
libtpu: 0.0.40
codegen_flags: <defaults>
</compile_context>

<pallas_src>
import functools

import numpy as np
import jax
import jax.numpy as jnp
from jax import lax
from jax.experimental import pallas as pl
from jax.experimental.pallas import tpu as pltpu


# ----------------------------------------------------------------------------
# small helpers
# ----------------------------------------------------------------------------

@functools.lru_cache(maxsize=None)
def _vmem_limit_bytes():
    """~75% of physical VMEM (96 MiB v5e/v6e, 48 MiB v7x), capped at 100 MiB."""
    cap = 64 * 1024 * 1024
    try:
        cap = int(pltpu.get_tpu_info().vmem_capacity_bytes)
    except Exception:
        pass
    return int(min(cap * 3 // 4, 100 * 1024 * 1024))


def _compiler_params(dimension_semantics):
    return pltpu.CompilerParams(dimension_semantics=dimension_semantics,
                                vmem_limit_bytes=_vmem_limit_bytes())


def _pick_row_chunk(h_out, w_out, c, budget_bytes=24 * 1024):
    """Output rows per accumulator chunk so the live f32 tile stays in vregs."""
    per_row = max(1, w_out * c * 4)
    return max(1, min(h_out, budget_bytes // per_row))


def _pick_seq_tile(s, target=1024):
    """Largest multiple-of-8 divisor of s (<= target); falls back to the full dim
    (a full-extent block is always (8,128)-legal)."""
    t = min(target, s)
    t -= t % 8
    while t >= 8:
        if s % t == 0:
            return t
        t -= 8
    return s


def fold_bn(bn_params, eps=1e-5):
    gamma, beta, mean, var = bn_params
    scale = gamma / jnp.sqrt(var + eps)
    shift = beta - mean * scale
    return (scale.reshape(1, -1).astype(jnp.float32),
            shift.reshape(1, -1).astype(jnp.float32))


# ----------------------------------------------------------------------------
# expand: 1x1x1 conv (matmul) + folded BN + ReLU, writing a zero-bordered PADDED
# bf16 output (pad fusion: no separate jnp.pad pass over the expanded tensor).
# Grid = (N, Dp); border depth planes are zero-filled, interior planes compute a
# per-row (W, Cin) x (Cin, Cexp) MXU matmul and store into the padded interior.
# ----------------------------------------------------------------------------

def _expand_pad_kernel(x_ref, w_ref, scale_ref, shift_ref, o_ref, *, pad, D, H, W):
    dpad = pl.program_id(1)
    o_ref[...] = jnp.zeros_like(o_ref)          # zero borders (and border planes)

    @pl.when((dpad >= pad) & (dpad < D + pad))
    def _interior():
        scale = scale_ref[0]
        shift = shift_ref[0]
        # Row-wise 2-D matmuls (Mosaic-safe; avoids 3-D dot / in-kernel reshape).
        for h in range(H):
            xr = x_ref[0, 0, h].astype(jnp.bfloat16)                  # (W, Cin)
            y = jnp.dot(xr, w_ref[...], preferred_element_type=jnp.float32)
            y = jnp.maximum(y * scale + shift, 0.0)
            o_ref[0, 0, pad + h, pad:pad + W, :] = y.astype(o_ref.dtype)


def expand_conv_bn_relu_padded(x, w_bf16, scale, shift, *, pad):
    N, D, H, W, Cin = x.shape
    Cexp = w_bf16.shape[1]
    Dp, Hp, Wp = D + 2 * pad, H + 2 * pad, W + 2 * pad

    def x_index(n, dp):
        # Clamp so border-plane steps still fetch a valid (ignored) plane.
        return (n, jnp.maximum(jnp.minimum(dp - pad, D - 1), 0), 0, 0, 0)

    kernel = functools.partial(_expand_pad_kernel, pad=pad, D=D, H=H, W=W)
    return pl.pallas_call(
        kernel,
        out_shape=jax.ShapeDtypeStruct((N, Dp, Hp, Wp, Cexp), jnp.bfloat16),
        grid=(N, Dp),
        in_specs=[
            pl.BlockSpec((1, 1, H, W, Cin), x_index),
            pl.BlockSpec((Cin, Cexp), lambda n, dp: (0, 0)),
            pl.BlockSpec((1, Cexp), lambda n, dp: (0, 0)),
            pl.BlockSpec((1, Cexp), lambda n, dp: (0, 0)),
        ],
        out_specs=pl.BlockSpec((1, 1, Hp, Wp, Cexp), lambda n, dp: (n, dp, 0, 0, 0)),
        compiler_params=_compiler_params(("parallel", "parallel")),
    )(x, w_bf16, scale, shift)


# ----------------------------------------------------------------------------
# depthwise KxKxK conv + folded BN + ReLU, with fused SE channel-sum output.
# Grid = (N, Dout).  The padded bf16 activation is passed ksize times with per-kd
# index maps, so the full ksize^3 tap reduction happens in one kernel invocation
# with the accumulator held in vregs (no scratch round trips, no kd grid axis).
# ----------------------------------------------------------------------------

def _depthwise_bn_relu_kernel(*args, ksize, stride, Hout, Wout, th):
    x_refs = args[:ksize]
    w_ref, scale_ref, shift_ref, o_ref, sum_ref = args[ksize:]
    C = scale_ref.shape[-1]
    scale = scale_ref[0]
    shift = shift_ref[0]

    csum = jnp.zeros((C,), jnp.float32)
    for h0 in range(0, Hout, th):
        cur = min(th, Hout - h0)
        acc = jnp.zeros((cur, Wout, C), jnp.float32)
        for kd in range(ksize):
            if stride == 1:
                # One aligned full-width load per (chunk, kd); kh/kw taps are static
                # in-register slices (no repeated misaligned VMEM loads).
                rows = x_refs[kd][0, 0, h0:h0 + cur + ksize - 1, :, :].astype(jnp.float32)
                for kh in range(ksize):
                    for kw in range(ksize):
                        tap = rows[kh:kh + cur, kw:kw + Wout, :]
                        acc = acc + tap * w_ref[kd, kh, kw, :]
            else:
                # TODO(synk): sublane-strided reads; functional but unoptimized.
                for kh in range(ksize):
                    for kw in range(ksize):
                        tap = x_refs[kd][0, 0,
                                         pl.ds(h0 * stride + kh, cur, stride),
                                         pl.ds(kw, Wout, stride), :].astype(jnp.float32)
                        acc = acc + tap * w_ref[kd, kh, kw, :]
        y = jnp.maximum(acc * scale + shift, 0.0)
        o_ref[0, 0, h0:h0 + cur] = y.astype(o_ref.dtype)
        csum = csum + jnp.sum(y, axis=(0, 1))       # fused SE spatial sum
    sum_ref[0, 0] = csum[None, :]


def depthwise_conv_bn_relu(x_pad, w_dw, scale, shift, *, ksize, stride,
                           Dout, Hout, Wout):
    N, Dp, Hp, Wp, C = x_pad.shape
    th = _pick_row_chunk(Hout, Wout, C)

    def _make_x_spec(kd):
        def idx(n, d):
            return (n, d * stride + kd, 0, 0, 0)
        return pl.BlockSpec((1, 1, Hp, Wp, C), idx)

    kernel = functools.partial(_depthwise_bn_relu_kernel, ksize=ksize,
                               stride=stride, Hout=Hout, Wout=Wout, th=th)
    return pl.pallas_call(
        kernel,
        out_shape=(
            jax.ShapeDtypeStruct((N, Dout, Hout, Wout, C), x_pad.dtype),
            jax.ShapeDtypeStruct((N, Dout, 1, C), jnp.float32),
        ),
        grid=(N, Dout),
        in_specs=[_make_x_spec(kd) for kd in range(ksize)] + [
            pl.BlockSpec((ksize, ksize, ksize, C), lambda n, d: (0, 0, 0, 0)),
            pl.BlockSpec((1, C), lambda n, d: (0, 0)),
            pl.BlockSpec((1, C), lambda n, d: (0, 0)),
        ],
        out_specs=(
            pl.BlockSpec((1, 1, Hout, Wout, C), lambda n, d: (n, d, 0, 0, 0)),
            pl.BlockSpec((1, 1, 1, C), lambda n, d: (n, d, 0, 0)),
        ),
        compiler_params=_compiler_params(("parallel", "parallel")),
    )(*([x_pad] * ksize), w_dw, scale, shift)


# ----------------------------------------------------------------------------
# SE-multiply + pointwise 1x1x1 projection conv + folded BN (+ residual), fused.
# bf16 MXU operands (gate applied in bf16), f32 accumulation, f32 output.
# ----------------------------------------------------------------------------

def _pointwise_bn_kernel(x_ref, g_ref, w_ref, scale_ref, shift_ref, o_ref):
    xg = x_ref[0] * g_ref[0]                                   # bf16 * bf16
    y = jnp.dot(xg, w_ref[...], preferred_element_type=jnp.float32)
    o_ref[0] = (y * scale_ref[0] + shift_ref[0]).astype(o_ref.dtype)


def _pointwise_bn_res_kernel(x_ref, g_ref, w_ref, scale_ref, shift_ref,
                             res_ref, o_ref):
    xg = x_ref[0] * g_ref[0]
    y = jnp.dot(xg, w_ref[...], preferred_element_type=jnp.float32)
    y = y * scale_ref[0] + shift_ref[0] + res_ref[0]
    o_ref[0] = y.astype(o_ref.dtype)


def pointwise_conv_bn(x3d, gate, w_bf16, scale, shift, residual=None, *,
                      target_ts=1024):
    N, S, C = x3d.shape
    Cout = w_bf16.shape[1]
    ts = _pick_seq_tile(S, target_ts)
    in_specs = [
        pl.BlockSpec((1, ts, C), lambda n, s: (n, s, 0)),
        pl.BlockSpec((1, 1, C), lambda n, s: (n, 0, 0)),
        pl.BlockSpec((C, Cout), lambda n, s: (0, 0)),
        pl.BlockSpec((1, Cout), lambda n, s: (0, 0)),
        pl.BlockSpec((1, Cout), lambda n, s: (0, 0)),
    ]
    args = [x3d, gate, w_bf16, scale, shift]
    kernel = _pointwise_bn_kernel
    if residual is not None:
        in_specs.append(pl.BlockSpec((1, ts, Cout), lambda n, s: (n, s, 0)))
        args.append(residual)
        kernel = _pointwise_bn_res_kernel
    return pl.pallas_call(
        kernel,
        out_shape=jax.ShapeDtypeStruct((N, S, Cout), jnp.float32),
        grid=(N, S // ts),
        in_specs=in_specs,
        out_specs=pl.BlockSpec((1, ts, Cout), lambda n, s: (n, s, 0)),
        compiler_params=_compiler_params(("parallel", "parallel")),
    )(*args)


# ----------------------------------------------------------------------------
# Parameters + forward wrappers
# ----------------------------------------------------------------------------

def init_params(key, in_channels, out_channels, kernel_size, expansion_rate, se):
    Cexp = expansion_rate * in_channels
    se_ch = max(1, int(in_channels * 0.25))
    ks = jax.random.split(key, 20)

    def u(k, shape, lo=-0.3, hi=0.3):
        return jax.random.uniform(k, shape, jnp.float32, lo, hi)

    params = {}
    if expansion_rate != 1:
        params['w_exp'] = u(ks[0], (in_channels, Cexp))
        params['bn_exp'] = (u(ks[1], (Cexp,), 0.5, 1.5), u(ks[2], (Cexp,)),
                            u(ks[3], (Cexp,)), u(ks[4], (Cexp,), 0.5, 1.5))
    params['w_dw'] = u(ks[5], (kernel_size, kernel_size, kernel_size, Cexp))
    params['bn_dw'] = (u(ks[6], (Cexp,), 0.5, 1.5), u(ks[7], (Cexp,)),
                       u(ks[8], (Cexp,)), u(ks[9], (Cexp,), 0.5, 1.5))
    if se:
        params['w_se1'] = u(ks[10], (Cexp, se_ch))
        params['w_se2'] = u(ks[11], (se_ch, Cexp))
    params['w_pw'] = u(ks[12], (Cexp, out_channels))
    params['bn_pw'] = (u(ks[13], (out_channels,), 0.5, 1.5),
                       u(ks[14], (out_channels,)),
                       u(ks[15], (out_channels,)),
                       u(ks[16], (out_channels,), 0.5, 1.5))
    return params


def mbconv_block_3d_ndhwc(x, params, *, in_channels, out_channels, kernel_size,
                          stride=1, expansion_rate=6, se=True):
    """MBConv block operating fully in NDHWC (no layout transposes)."""
    assert kernel_size in (3, 5), '-- MyError --: unsupported kernel size'
    pad = 1 if kernel_size == 3 else 2
    Cexp = expansion_rate * in_channels
    N, D, H, W, C = x.shape
    assert C == in_channels

    # expand 1x1x1 conv + BN + ReLU -> padded bf16 buffer (pad fusion)
    if expansion_rate != 1:
        scale_e, shift_e = fold_bn(params['bn_exp'])
        x_pad = expand_conv_bn_relu_padded(x, params['w_exp'].astype(jnp.bfloat16),
                                           scale_e, shift_e, pad=pad)
    else:
        # TODO(synk): no expand conv to fuse the padding into; one jnp.pad pass.
        x_pad = jnp.pad(x.astype(jnp.bfloat16),
                        ((0, 0), (pad, pad), (pad, pad), (pad, pad), (0, 0)))

    Dout = (D + 2 * pad - kernel_size) // stride + 1
    Hout = (H + 2 * pad - kernel_size) // stride + 1
    Wout = (W + 2 * pad - kernel_size) // stride + 1

    # depthwise KxKxK conv + BN + ReLU (+ fused SE spatial sums), bf16 output
    scale_d, shift_d = fold_bn(params['bn_dw'])
    y_dw, spatial_sums = depthwise_conv_bn_relu(
        x_pad, params['w_dw'], scale_d, shift_d,
        ksize=kernel_size, stride=stride, Dout=Dout, Hout=Hout, Wout=Wout)

    S = Dout * Hout * Wout
    y3d = y_dw.reshape(N, S, Cexp)

    # squeeze-excite gate: pooling was fused into the depthwise kernel; the two
    # tiny SE FCs + sigmoid are negligible and run in plain JAX on the MXU.
    if se:
        pooled = spatial_sums[:, :, 0, :].sum(axis=1) / float(S)      # (N, Cexp)
        h = jnp.maximum(pooled @ params['w_se1'], 0.0)
        g = jax.nn.sigmoid(h @ params['w_se2'])
        gate = g[:, None, :].astype(jnp.bfloat16)
    else:
        gate = jnp.ones((N, 1, Cexp), jnp.bfloat16)

    # SE-multiply + pointwise 1x1x1 conv + BN (+ residual), f32 output
    scale_p, shift_p = fold_bn(params['bn_pw'])
    residual = None
    if in_channels == out_channels and stride == 1:
        residual = x.reshape(N, D * H * W, in_channels).astype(jnp.float32)
    out3d = pointwise_conv_bn(y3d, gate, params['w_pw'].astype(jnp.bfloat16),
                              scale_p, shift_p, residual)
    return out3d.reshape(N, Dout, Hout, Wout, out_channels)


def mbconv_block_3d(x_ncdhw, params, **kwargs):
    """PyTorch-parity wrapper: NCDHW in / NCDHW out."""
    # TODO(synk): keep the surrounding model in NDHWC and call
    #             mbconv_block_3d_ndhwc directly to avoid these two HBM transposes.
    x = jnp.transpose(x_ncdhw, (0, 2, 3, 4, 1))        # NCDHW -> NDHWC
    out = mbconv_block_3d_ndhwc(x, params, **kwargs)
    return jnp.transpose(out, (0, 4, 1, 2, 3))         # NDHWC -> NCDHW


# ----------------------------------------------------------------------------
# Pure-JAX reference (mirrors the kernels' bf16 storage / MXU casts) for checks
# ----------------------------------------------------------------------------

def reference_forward(x_ncdhw, params, *, in_channels, out_channels,
                      kernel_size, stride=1, expansion_rate=6, se=True):
    pad = 1 if kernel_size == 3 else 2
    Cexp = expansion_rate * in_channels
    x = jnp.transpose(x_ncdhw, (0, 2, 3, 4, 1)).astype(jnp.float32)

    def bn(v, p):
        gamma, beta, mean, var = p
        return (v - mean) * gamma / jnp.sqrt(var + 1e-5) + beta

    if expansion_rate != 1:
        e = jnp.einsum('ndhwc,ce->ndhwe',
                       x.astype(jnp.bfloat16),
                       params['w_exp'].astype(jnp.bfloat16),
                       preferred_element_type=jnp.float32)
        y = jnp.maximum(bn(e, params['bn_exp']), 0.0).astype(jnp.bfloat16)
    else:
        y = x.astype(jnp.bfloat16)

    yp = jnp.pad(y.astype(jnp.float32),
                 ((0, 0), (pad, pad), (pad, pad), (pad, pad), (0, 0)))
    w_dw = params['w_dw'].reshape(kernel_size, kernel_size, kernel_size, 1, Cexp)
    dw = lax.conv_general_dilated(
        yp, w_dw, window_strides=(stride,) * 3, padding='VALID',
        dimension_numbers=('NDHWC', 'DHWIO', 'NDHWC'),
        feature_group_count=Cexp, precision=lax.Precision.HIGHEST)
    dw = jnp.maximum(bn(dw, params['bn_dw']), 0.0)

    if se:
        pooled = dw.mean(axis=(1, 2, 3))
        h = jnp.maximum(pooled @ params['w_se1'], 0.0)
        g = jax.nn.sigmoid(h @ params['w_se2'])
    else:
        g = jnp.ones((dw.shape[0], Cexp), jnp.float32)

    z = dw.astype(jnp.bfloat16) * g[:, None, None, None, :].astype(jnp.bfloat16)
    o = jnp.einsum('ndhwc,co->ndhwo',
                   z, params['w_pw'].astype(jnp.bfloat16),
                   preferred_element_type=jnp.float32)
    out = bn(o, params['bn_pw'])
    if in_channels == out_channels and stride == 1:
        out = out + x
    return jnp.transpose(out, (0, 4, 1, 2, 3))


# ----------------------------------------------------------------------------

if __name__ == "__main__":
    key = jax.random.PRNGKey(0)
    k_x, k_p = jax.random.split(key)

    N, Cin, D, H, W = 2, 4, 8, 8, 8
    Cout, ksize, stride, exp_rate, use_se = 4, 3, 1, 6, True

    x = jax.random.normal(k_x, (N, Cin, D, H, W), jnp.float32)
    params = init_params(k_p, Cin, Cout, ksize, exp_rate, use_se)

    out = mbconv_block_3d(x, params, in_channels=Cin, out_channels=Cout,
                          kernel_size=ksize, stride=stride,
                          expansion_rate=exp_rate, se=use_se)
    out = jax.block_until_ready(out)
    assert out.shape == (N, Cout, D, H, W)

    ref = reference_forward(x, params, in_channels=Cin, out_channels=Cout,
                            kernel_size=ksize, stride=stride,
                            expansion_rate=exp_rate, se=use_se)
    np.testing.assert_allclose(np.asarray(out), np.asarray(ref),
                               rtol=1e-2, atol=1e-2)
    print("KERNEL_OK")
</pallas_src>

<mosaic_0001>
module attributes {stable_mosaic.version = 11 : i64} {
  func.func @_expand_pad_kernel(%arg0: i32, %arg1: i32, %arg2: memref<1x1x8x8x4xf32, #tpu.memory_space<vmem>>, %arg3: memref<4x24xbf16, #tpu.memory_space<vmem>>, %arg4: memref<1x24xf32, #tpu.memory_space<vmem>>, %arg5: memref<1x24xf32, #tpu.memory_space<vmem>>, %arg6: memref<1x1x10x10x24xbf16, #tpu.memory_space<vmem>>) attributes {dimension_semantics = [#tpu.dimension_semantics<parallel>, #tpu.dimension_semantics<parallel>], iteration_bounds = array<i64: 2, 10>, scalar_prefetch = 0 : i64, scratch_operands = 0 : i64, tpu.core_type = #tpu.core_type<tc>, window_params = [{transform_indices = @transform_0, window_bounds = array<i64: 1, 1, 8, 8, 4>}, {pipeline_mode = #tpu.pipeline_mode<synchronous>, transform_indices = @transform_1, window_bounds = array<i64: 4, 24>}, {pipeline_mode = #tpu.pipeline_mode<synchronous>, transform_indices = @transform_2, window_bounds = array<i64: 1, 24>}, {pipeline_mode = #tpu.pipeline_mode<synchronous>, transform_indices = @transform_3, window_bounds = array<i64: 1, 24>}, {transform_indices = @transform_4, window_bounds = array<i64: 1, 1, 10, 10, 24>}]} {
    %cst = arith.constant 0.000000e+00 : bf16
    %0 = vector.broadcast %cst : bf16 to vector<1x1x10x10x24xbf16>
    %c0 = arith.constant 0 : index
    %c0_0 = arith.constant 0 : index
    %c0_1 = arith.constant 0 : index
    %c0_2 = arith.constant 0 : index
    %c0_3 = arith.constant 0 : index
    %1 = vector.load %arg6[%c0, %c0_0, %c0_1, %c0_2, %c0_3] : memref<1x1x10x10x24xbf16, #tpu.memory_space<vmem>>, vector<1x1x10x10x24xbf16>
    tpu.vector_store %arg6[%c0, %c0_0, %c0_1, %c0_2, %c0_3], %0 {strides = array<i32>} : memref<1x1x10x10x24xbf16, #tpu.memory_space<vmem>>, vector<1x1x10x10x24xbf16>,
    %c1_i32 = arith.constant 1 : i32
    %2 = arith.cmpi sge, %arg1, %c1_i32 : i32
    %c9_i32 = arith.constant 9 : i32
    %3 = arith.cmpi slt, %arg1, %c9_i32 : i32
    %4 = arith.andi %2, %3 : i1
    %5 = arith.extui %4 : i1 to i32
    %c0_i32 = arith.constant 0 : i32
    %6 = arith.cmpi ne, %5, %c0_i32 : i32
    scf.if %6 {
      %c0_4 = arith.constant 0 : index
      %c0_5 = arith.constant 0 : index
      %7 = vector.load %arg4[%c0_4, %c0_5] : memref<1x24xf32, #tpu.memory_space<vmem>>, vector<1x24xf32>
      %8 = vector.shape_cast %7 : vector<1x24xf32> to vector<24xf32>
      %c0_6 = arith.constant 0 : index
      %c0_7 = arith.constant 0 : index
      %9 = vector.load %arg5[%c0_6, %c0_7] : memref<1x24xf32, #tpu.memory_space<vmem>>, vector<1x24xf32>
      %10 = vector.shape_cast %9 : vector<1x24xf32> to vector<24xf32>
      %c0_8 = arith.constant 0 : index
      %c0_9 = arith.constant 0 : index
      %c0_10 = arith.constant 0 : index
      %c0_11 = arith.constant 0 : index
      %c0_12 = arith.constant 0 : index
      %11 = vector.load %arg2[%c0_8, %c0_9, %c0_10, %c0_11, %c0_12] : memref<1x1x8x8x4xf32, #tpu.memory_space<vmem>>, vector<1x1x1x8x4xf32>
      %12 = vector.shape_cast %11 : vector<1x1x1x8x4xf32> to vector<8x4xf32>
      %13 = arith.truncf %12 : vector<8x4xf32> to vector<8x4xbf16>
      %c0_13 = arith.constant 0 : index
      %c0_14 = arith.constant 0 : index
      %14 = vector.load %arg3[%c0_13, %c0_14] : memref<4x24xbf16, #tpu.memory_space<vmem>>, vector<4x24xbf16>
      %cst_15 = arith.constant dense<0.000000e+00> : vector<8x24xf32>
      %15 = tpu.matmul %13, %14, %cst_15 {dimension_numbers = #tpu.dot_dimension_numbers<[1], [0], [0], [1], [0, 0, 1, 1], [], []>} : vector<8x4xbf16>, vector<4x24xbf16>, vector<8x24xf32> -> vector<8x24xf32>
      %16 = vector.shape_cast %8 : vector<24xf32> to vector<1x24xf32>
      %17 = vector.broadcast %16 : vector<1x24xf32> to vector<8x24xf32>
      %18 = arith.mulf %15, %17 : vector<8x24xf32>
      %19 = vector.shape_cast %10 : vector<24xf32> to vector<1x24xf32>
      %20 = vector.broadcast %19 : vector<1x24xf32> to vector<8x24xf32>
      %21 = arith.addf %18, %20 : vector<8x24xf32>
      %cst_16 = arith.constant 0.000000e+00 : f32
      %22 = vector.broadcast %cst_16 : f32 to vector<8x24xf32>
      %23 = arith.maximumf %21, %22 : vector<8x24xf32>
      %24 = arith.truncf %23 : vector<8x24xf32> to vector<8x24xbf16>
      %c0_17 = arith.constant 0 : index
      %c0_18 = arith.constant 0 : index
      %c1 = arith.constant 1 : index
      %c1_19 = arith.constant 1 : index
      %c0_20 = arith.constant 0 : index
      %25 = vector.load %arg6[%c0_17, %c0_18, %c1, %c1_19, %c0_20] : memref<1x1x10x10x24xbf16, #tpu.memory_space<vmem>>, vector<1x1x1x8x24xbf16>
      %26 = vector.shape_cast %25 : vector<1x1x1x8x24xbf16> to vector<8x24xbf16>
      %27 = vector.shape_cast %24 : vector<8x24xbf16> to vector<1x1x1x8x24xbf16>
      tpu.vector_store %arg6[%c0_17, %c0_18, %c1, %c1_19, %c0_20], %27 {strides = array<i32>} : memref<1x1x10x10x24xbf16, #tpu.memory_space<vmem>>, vector<1x1x1x8x24xbf16>,
      %c0_21 = arith.constant 0 : index
      %c0_22 = arith.constant 0 : index
      %c1_23 = arith.constant 1 : index
      %c0_24 = arith.constant 0 : index
      %c0_25 = arith.constant 0 : index
      %28 = vector.load %arg2[%c0_21, %c0_22, %c1_23, %c0_24, %c0_25] : memref<1x1x8x8x4xf32, #tpu.memory_space<vmem>>, vector<1x1x1x8x4xf32>
      %29 = vector.shape_cast %28 : vector<1x1x1x8x4xf32> to vector<8x4xf32>
      %30 = arith.truncf %29 : vector<8x4xf32> to vector<8x4xbf16>
      %c0_26 = arith.constant 0 : index
      %c0_27 = arith.constant 0 : index
      %31 = vector.load %arg3[%c0_26, %c0_27] : memref<4x24xbf16, #tpu.memory_space<vmem>>, vector<4x24xbf16>
      %cst_28 = arith.constant dense<0.000000e+00> : vector<8x24xf32>
      %32 = tpu.matmul %30, %31, %cst_28 {dimension_numbers = #tpu.dot_dimension_numbers<[1], [0], [0], [1], [0, 0, 1, 1], [], []>} : vector<8x4xbf16>, vector<4x24xbf16>, vector<8x24xf32> -> vector<8x24xf32>
      %33 = vector.shape_cast %8 : vector<24xf32> to vector<1x24xf32>
      %34 = vector.broadcast %33 : vector<1x24xf32> to vector<8x24xf32>
      %35 = arith.mulf %32, %34 : vector<8x24xf32>
      %36 = vector.shape_cast %10 : vector<24xf32> to vector<1x24xf32>
      %37 = vector.broadcast %36 : vector<1x24xf32> to vector<8x24xf32>
      %38 = arith.addf %35, %37 : vector<8x24xf32>
      %cst_29 = arith.constant 0.000000e+00 : f32
      %39 = vector.broadcast %cst_29 : f32 to vector<8x24xf32>
      %40 = arith.maximumf %38, %39 : vector<8x24xf32>
      %41 = arith.truncf %40 : vector<8x24xf32> to vector<8x24xbf16>
      %c0_30 = arith.constant 0 : index
      %c0_31 = arith.constant 0 : index
      %c2 = arith.constant 2 : index
      %c1_32 = arith.constant 1 : index
      %c0_33 = arith.constant 0 : index
      %42 = vector.load %arg6[%c0_30, %c0_31, %c2, %c1_32, %c0_33] : memref<1x1x10x10x24xbf16, #tpu.memory_space<vmem>>, vector<1x1x1x8x24xbf16>
      %43 = vector.shape_cast %42 : vector<1x1x1x8x24xbf16> to vector<8x24xbf16>
      %44 = vector.shape_cast %41 : vector<8x24xbf16> to vector<1x1x1x8x24xbf16>
      tpu.vector_store %arg6[%c0_30, %c0_31, %c2, %c1_32, %c0_33], %44 {strides = array<i32>} : memref<1x1x10x10x24xbf16, #tpu.memory_space<vmem>>, vector<1x1x1x8x24xbf16>,
      %c0_34 = arith.constant 0 : index
      %c0_35 = arith.constant 0 : index
      %c2_36 = arith.constant 2 : index
      %c0_37 = arith.constant 0 : index
      %c0_38 = arith.constant 0 : index
      %45 = vector.load %arg2[%c0_34, %c0_35, %c2_36, %c0_37, %c0_38] : memref<1x1x8x8x4xf32, #tpu.memory_space<vmem>>, vector<1x1x1x8x4xf32>
      %46 = vector.shape_cast %45 : vector<1x1x1x8x4xf32> to vector<8x4xf32>
      %47 = arith.truncf %46 : vector<8x4xf32> to vector<8x4xbf16>
      %c0_39 = arith.constant 0 : index
      %c0_40 = arith.constant 0 : index
      %48 = vector.load %arg3[%c0_39, %c0_40] : memref<4x24xbf16, #tpu.memory_space<vmem>>, vector<4x24xbf16>
      %cst_41 = arith.constant dense<0.000000e+00> : vector<8x24xf32>
      %49 = tpu.matmul %47, %48, %cst_41 {dimension_numbers = #tpu.dot_dimension_numbers<[1], [0], [0], [1], [0, 0, 1, 1], [], []>} : vector<8x4xbf16>, vector<4x24xbf16>, vector<8x24xf32> -> vector<8x24xf32>
      %50 = vector.shape_cast %8 : vector<24xf32> to vector<1x24xf32>
      %51 = vector.broadcast %50 : vector<1x24xf32> to vector<8x24xf32>
      %52 = arith.mulf %49, %51 : vector<8x24xf32>
      %53 = vector.shape_cast %10 : vector<24xf32> to vector<1x24xf32>
      %54 = vector.broadcast %53 : vector<1x24xf32> to vector<8x24xf32>
      %55 = arith.addf %52, %54 : vector<8x24xf32>
      %cst_42 = arith.constant 0.000000e+00 : f32
      %56 = vector.broadcast %cst_42 : f32 to vector<8x24xf32>
      %57 = arith.maximumf %55, %56 : vector<8x24xf32>
      %58 = arith.truncf %57 : vector<8x24xf32> to vector<8x24xbf16>
      %c0_43 = arith.constant 0 : index
      %c0_44 = arith.constant 0 : index
      %c3 = arith.constant 3 : index
      %c1_45 = arith.constant 1 : index
      %c0_46 = arith.constant 0 : index
      %59 = vector.load %arg6[%c0_43, %c0_44, %c3, %c1_45, %c0_46] : memref<1x1x10x10x24xbf16, #tpu.memory_space<vmem>>, vector<1x1x1x8x24xbf16>
      %60 = vector.shape_cast %59 : vector<1x1x1x8x24xbf16> to vector<8x24xbf16>
      %61 = vector.shape_cast %58 : vector<8x24xbf16> to vector<1x1x1x8x24xbf16>
      tpu.vector_store %arg6[%c0_43, %c0_44, %c3, %c1_45, %c0_46], %61 {strides = array<i32>} : memref<1x1x10x10x24xbf16, #tpu.memory_space<vmem>>, vector<1x1x1x8x24xbf16>,
      %c0_47 = arith.constant 0 : index
      %c0_48 = arith.constant 0 : index
      %c3_49 = arith.constant 3 : index
      %c0_50 = arith.constant 0 : index
      %c0_51 = arith.constant 0 : index
      %62 = vector.load %arg2[%c0_47, %c0_48, %c3_49, %c0_50, %c0_51] : memref<1x1x8x8x4xf32, #tpu.memory_space<vmem>>, vector<1x1x1x8x4xf32>
      %63 = vector.shape_cast %62 : vector<1x1x1x8x4xf32> to vector<8x4xf32>
      %64 = arith.truncf %63 : vector<8x4xf32> to vector<8x4xbf16>
      %c0_52 = arith.constant 0 : index
      %c0_53 = arith.constant 0 : index
      %65 = vector.load %arg3[%c0_52, %c0_53] : memref<4x24xbf16, #tpu.memory_space<vmem>>, vector<4x24xbf16>
      %cst_54 = arith.constant dense<0.000000e+00> : vector<8x24xf32>
      %66 = tpu.matmul %64, %65, %cst_54 {dimension_numbers = #tpu.dot_dimension_numbers<[1], [0], [0], [1], [0, 0, 1, 1], [], []>} : vector<8x4xbf16>, vector<4x24xbf16>, vector<8x24xf32> -> vector<8x24xf32>
      %67 = vector.shape_cast %8 : vector<24xf32> to vector<1x24xf32>
      %68 = vector.broadcast %67 : vector<1x24xf32> to vector<8x24xf32>
      %69 = arith.mulf %66, %68 : vector<8x24xf32>
      %70 = vector.shape_cast %10 : vector<24xf32> to vector<1x24xf32>
      %71 = vector.broadcast %70 : vector<1x24xf32> to vector<8x24xf32>
      %72 = arith.addf %69, %71 : vector<8x24xf32>
      %cst_55 = arith.constant 0.000000e+00 : f32
      %73 = vector.broadcast %cst_55 : f32 to vector<8x24xf32>
      %74 = arith.maximumf %72, %73 : vector<8x24xf32>
      %75 = arith.truncf %74 : vector<8x24xf32> to vector<8x24xbf16>
      %c0_56 = arith.constant 0 : index
      %c0_57 = arith.constant 0 : index
      %c4 = arith.constant 4 : index
      %c1_58 = arith.constant 1 : index
      %c0_59 = arith.constant 0 : index
      %76 = vector.load %arg6[%c0_56, %c0_57, %c4, %c1_58, %c0_59] : memref<1x1x10x10x24xbf16, #tpu.memory_space<vmem>>, vector<1x1x1x8x24xbf16>
      %77 = vector.shape_cast %76 : vector<1x1x1x8x24xbf16> to vector<8x24xbf16>
      %78 = vector.shape_cast %75 : vector<8x24xbf16> to vector<1x1x1x8x24xbf16>
      tpu.vector_store %arg6[%c0_56, %c0_57, %c4, %c1_58, %c0_59], %78 {strides = array<i32>} : memref<1x1x10x10x24xbf16, #tpu.memory_space<vmem>>, vector<1x1x1x8x24xbf16>,
      %c0_60 = arith.constant 0 : index
      %c0_61 = arith.constant 0 : index
      %c4_62 = arith.constant 4 : index
      %c0_63 = arith.constant 0 : index
      %c0_64 = arith.constant 0 : index
      %79 = vector.load %arg2[%c0_60, %c0_61, %c4_62, %c0_63, %c0_64] : memref<1x1x8x8x4xf32, #tpu.memory_space<vmem>>, vector<1x1x1x8x4xf32>
      %80 = vector.shape_cast %79 : vector<1x1x1x8x4xf32> to vector<8x4xf32>
      %81 = arith.truncf %80 : vector<8x4xf32> to vector<8x4xbf16>
      %c0_65 = arith.constant 0 : index
      %c0_66 = arith.constant 0 : index
      %82 = vector.load %arg3[%c0_65, %c0_66] : memref<4x24xbf16, #tpu.memory_space<vmem>>, vector<4x24xbf16>
      %cst_67 = arith.constant dense<0.000000e+00> : vector<8x24xf32>
      %83 = tpu.matmul %81, %82, %cst_67 {dimension_numbers = #tpu.dot_dimension_numbers<[1], [0], [0], [1], [0, 0, 1, 1], [], []>} : vector<8x4xbf16>, vector<4x24xbf16>, vector<8x24xf32> -> vector<8x24xf32>
      %84 = vector.shape_cast %8 : vector<24xf32> to vector<1x24xf32>
      %85 = vector.broadcast %84 : vector<1x24xf32> to vector<8x24xf32>
      %86 = arith.mulf %83, %85 : vector<8x24xf32>
      %87 = vector.shape_cast %10 : vector<24xf32> to vector<1x24xf32>
      %88 = vector.broadcast %87 : vector<1x24xf32> to vector<8x24xf32>
      %89 = arith.addf %86, %88 : vector<8x24xf32>
      %cst_68 = arith.constant 0.000000e+00 : f32
      %90 = vector.broadcast %cst_68 : f32 to vector<8x24xf32>
      %91 = arith.maximumf %89, %90 : vector<8x24xf32>
      %92 = arith.truncf %91 : vector<8x24xf32> to vector<8x24xbf16>
      %c0_69 = arith.constant 0 : index
      %c0_70 = arith.constant 0 : index
      %c5 = arith.constant 5 : index
      %c1_71 = arith.constant 1 : index
      %c0_72 = arith.constant 0 : index
      %93 = vector.load %arg6[%c0_69, %c0_70, %c5, %c1_71, %c0_72] : memref<1x1x10x10x24xbf16, #tpu.memory_space<vmem>>, vector<1x1x1x8x24xbf16>
      %94 = vector.shape_cast %93 : vector<1x1x1x8x24xbf16> to vector<8x24xbf16>
      %95 = vector.shape_cast %92 : vector<8x24xbf16> to vector<1x1x1x8x24xbf16>
      tpu.vector_store %arg6[%c0_69, %c0_70, %c5, %c1_71, %c0_72], %95 {strides = array<i32>} : memref<1x1x10x10x24xbf16, #tpu.memory_space<vmem>>, vector<1x1x1x8x24xbf16>,
      %c0_73 = arith.constant 0 : index
      %c0_74 = arith.constant 0 : index
      %c5_75 = arith.constant 5 : index
      %c0_76 = arith.constant 0 : index
      %c0_77 = arith.constant 0 : index
      %96 = vector.load %arg2[%c0_73, %c0_74, %c5_75, %c0_76, %c0_77] : memref<1x1x8x8x4xf32, #tpu.memory_space<vmem>>, vector<1x1x1x8x4xf32>
      %97 = vector.shape_cast %96 : vector<1x1x1x8x4xf32> to vector<8x4xf32>
      %98 = arith.truncf %97 : vector<8x4xf32> to vector<8x4xbf16>
      %c0_78 = arith.constant 0 : index
      %c0_79 = arith.constant 0 : index
      %99 = vector.load %arg3[%c0_78, %c0_79] : memref<4x24xbf16, #tpu.memory_space<vmem>>, vector<4x24xbf16>
      %cst_80 = arith.constant dense<0.000000e+00> : vector<8x24xf32>
      %100 = tpu.matmul %98, %99, %cst_80 {dimension_numbers = #tpu.dot_dimension_numbers<[1], [0], [0], [1], [0, 0, 1, 1], [], []>} : vector<8x4xbf16>, vector<4x24xbf16>, vector<8x24xf32> -> vector<8x24xf32>
      %101 = vector.shape_cast %8 : vector<24xf32> to vector<1x24xf32>
      %102 = vector.broadcast %101 : vector<1x24xf32> to vector<8x24xf32>
      %103 = arith.mulf %100, %102 : vector<8x24xf32>
      %104 = vector.shape_cast %10 : vector<24xf32> to vector<1x24xf32>
      %105 = vector.broadcast %104 : vector<1x24xf32> to vector<8x24xf32>
      %106 = arith.addf %103, %105 : vector<8x24xf32>
      %cst_81 = arith.constant 0.000000e+00 : f32
      %107 = vector.broadcast %cst_81 : f32 to vector<8x24xf32>
      %108 = arith.maximumf %106, %107 : vector<8x24xf32>
      %109 = arith.truncf %108 : vector<8x24xf32> to vector<8x24xbf16>
      %c0_82 = arith.constant 0 : index
      %c0_83 = arith.constant 0 : index
      %c6 = arith.constant 6 : index
      %c1_84 = arith.constant 1 : index
      %c0_85 = arith.constant 0 : index
      %110 = vector.load %arg6[%c0_82, %c0_83, %c6, %c1_84, %c0_85] : memref<1x1x10x10x24xbf16, #tpu.memory_space<vmem>>, vector<1x1x1x8x24xbf16>
      %111 = vector.shape_cast %110 : vector<1x1x1x8x24xbf16> to vector<8x24xbf16>
      %112 = vector.shape_cast %109 : vector<8x24xbf16> to vector<1x1x1x8x24xbf16>
      tpu.vector_store %arg6[%c0_82, %c0_83, %c6, %c1_84, %c0_85], %112 {strides = array<i32>} : memref<1x1x10x10x24xbf16, #tpu.memory_space<vmem>>, vector<1x1x1x8x24xbf16>,
      %c0_86 = arith.constant 0 : index
      %c0_87 = arith.constant 0 : index
      %c6_88 = arith.constant 6 : index
      %c0_89 = arith.constant 0 : index
      %c0_90 = arith.constant 0 : index
      %113 = vector.load %arg2[%c0_86, %c0_87, %c6_88, %c0_89, %c0_90] : memref<1x1x8x8x4xf32, #tpu.memory_space<vmem>>, vector<1x1x1x8x4xf32>
      %114 = vector.shape_cast %113 : vector<1x1x1x8x4xf32> to vector<8x4xf32>
      %115 = arith.truncf %114 : vector<8x4xf32> to vector<8x4xbf16>
      %c0_91 = arith.constant 0 : index
      %c0_92 = arith.constant 0 : index
      %116 = vector.load %arg3[%c0_91, %c0_92] : memref<4x24xbf16, #tpu.memory_space<vmem>>, vector<4x24xbf16>
      %cst_93 = arith.constant dense<0.000000e+00> : vector<8x24xf32>
      %117 = tpu.matmul %115, %116, %cst_93 {dimension_numbers = #tpu.dot_dimension_numbers<[1], [0], [0], [1], [0, 0, 1, 1], [], []>} : vector<8x4xbf16>, vector<4x24xbf16>, vector<8x24xf32> -> vector<8x24xf32>
      %118 = vector.shape_cast %8 : vector<24xf32> to vector<1x24xf32>
      %119 = vector.broadcast %118 : vector<1x24xf32> to vector<8x24xf32>
      %120 = arith.mulf %117, %119 : vector<8x24xf32>
      %121 = vector.shape_cast %10 : vector<24xf32> to vector<1x24xf32>
      %122 = vector.broadcast %121 : vector<1x24xf32> to vector<8x24xf32>
      %123 = arith.addf %120, %122 : vector<8x24xf32>
      %cst_94 = arith.constant 0.000000e+00 : f32
      %124 = vector.broadcast %cst_94 : f32 to vector<8x24xf32>
      %125 = arith.maximumf %123, %124 : vector<8x24xf32>
      %126 = arith.truncf %125 : vector<8x24xf32> to vector<8x24xbf16>
      %c0_95 = arith.constant 0 : index
      %c0_96 = arith.constant 0 : index
      %c7 = arith.constant 7 : index
      %c1_97 = arith.constant 1 : index
      %c0_98 = arith.constant 0 : index
      %127 = vector.load %arg6[%c0_95, %c0_96, %c7, %c1_97, %c0_98] : memref<1x1x10x10x24xbf16, #tpu.memory_space<vmem>>, vector<1x1x1x8x24xbf16>
      %128 = vector.shape_cast %127 : vector<1x1x1x8x24xbf16> to vector<8x24xbf16>
      %129 = vector.shape_cast %126 : vector<8x24xbf16> to vector<1x1x1x8x24xbf16>
      tpu.vector_store %arg6[%c0_95, %c0_96, %c7, %c1_97, %c0_98], %129 {strides = array<i32>} : memref<1x1x10x10x24xbf16, #tpu.memory_space<vmem>>, vector<1x1x1x8x24xbf16>,
      %c0_99 = arith.constant 0 : index
      %c0_100 = arith.constant 0 : index
      %c7_101 = arith.constant 7 : index
      %c0_102 = arith.constant 0 : index
      %c0_103 = arith.constant 0 : index
      %130 = vector.load %arg2[%c0_99, %c0_100, %c7_101, %c0_102, %c0_103] : memref<1x1x8x8x4xf32, #tpu.memory_space<vmem>>, vector<1x1x1x8x4xf32>
      %131 = vector.shape_cast %130 : vector<1x1x1x8x4xf32> to vector<8x4xf32>
      %132 = arith.truncf %131 : vector<8x4xf32> to vector<8x4xbf16>
      %c0_104 = arith.constant 0 : index
      %c0_105 = arith.constant 0 : index
      %133 = vector.load %arg3[%c0_104, %c0_105] : memref<4x24xbf16, #tpu.memory_space<vmem>>, vector<4x24xbf16>
      %cst_106 = arith.constant dense<0.000000e+00> : vector<8x24xf32>
      %134 = tpu.matmul %132, %133, %cst_106 {dimension_numbers = #tpu.dot_dimension_numbers<[1], [0], [0], [1], [0, 0, 1, 1], [], []>} : vector<8x4xbf16>, vector<4x24xbf16>, vector<8x24xf32> -> vector<8x24xf32>
      %135 = vector.shape_cast %8 : vector<24xf32> to vector<1x24xf32>
      %136 = vector.broadcast %135 : vector<1x24xf32> to vector<8x24xf32>
      %137 = arith.mulf %134, %136 : vector<8x24xf32>
      %138 = vector.shape_cast %10 : vector<24xf32> to vector<1x24xf32>
      %139 = vector.broadcast %138 : vector<1x24xf32> to vector<8x24xf32>
      %140 = arith.addf %137, %139 : vector<8x24xf32>
      %cst_107 = arith.constant 0.000000e+00 : f32
      %141 = vector.broadcast %cst_107 : f32 to vector<8x24xf32>
      %142 = arith.maximumf %140, %141 : vector<8x24xf32>
      %143 = arith.truncf %142 : vector<8x24xf32> to vector<8x24xbf16>
      %c0_108 = arith.constant 0 : index
      %c0_109 = arith.constant 0 : index
      %c8 = arith.constant 8 : index
      %c1_110 = arith.constant 1 : index
      %c0_111 = arith.constant 0 : index
      %144 = vector.load %arg6[%c0_108, %c0_109, %c8, %c1_110, %c0_111] : memref<1x1x10x10x24xbf16, #tpu.memory_space<vmem>>, vector<1x1x1x8x24xbf16>
      %145 = vector.shape_cast %144 : vector<1x1x1x8x24xbf16> to vector<8x24xbf16>
      %146 = vector.shape_cast %143 : vector<8x24xbf16> to vector<1x1x1x8x24xbf16>
      tpu.vector_store %arg6[%c0_108, %c0_109, %c8, %c1_110, %c0_111], %146 {strides = array<i32>} : memref<1x1x10x10x24xbf16, #tpu.memory_space<vmem>>, vector<1x1x1x8x24xbf16>,
    } else {
    }
    return
  }
  func.func @transform_0(%arg0: i32, %arg1: i32) -> (i32, i32, i32, i32, i32) {
    %c1_i32 = arith.constant 1 : i32
    %0 = arith.subi %arg1, %c1_i32 : i32
    %c7_i32 = arith.constant 7 : i32
    %1 = arith.minsi %0, %c7_i32 : i32
    %c0_i32 = arith.constant 0 : i32
    %2 = arith.maxsi %1, %c0_i32 : i32
    %c0_i32_0 = arith.constant 0 : i32
    %c0_i32_1 = arith.constant 0 : i32
    %c0_i32_2 = arith.constant 0 : i32
    %c0_i32_3 = arith.constant 0 : i32
    return %arg0, %2, %c0_i32_0, %c0_i32_1, %c0_i32_2 : i32, i32, i32, i32, i32
  }
  func.func @transform_1(%arg0: i32, %arg1: i32) -> (i32, i32) {
    %c0_i32 = arith.constant 0 : i32
    %c0_i32_0 = arith.constant 0 : i32
    %c0_i32_1 = arith.constant 0 : i32
    return %c0_i32, %c0_i32_0 : i32, i32
  }
  func.func @transform_2(%arg0: i32, %arg1: i32) -> (i32, i32) {
    %c0_i32 = arith.constant 0 : i32
    %c0_i32_0 = arith.constant 0 : i32
    %c0_i32_1 = arith.constant 0 : i32
    return %c0_i32, %c0_i32_0 : i32, i32
  }
  func.func @transform_3(%arg0: i32, %arg1: i32) -> (i32, i32) {
    %c0_i32 = arith.constant 0 : i32
    %c0_i32_0 = arith.constant 0 : i32
    %c0_i32_1 = arith.constant 0 : i32
    return %c0_i32, %c0_i32_0 : i32, i32
  }
  func.func @transform_4(%arg0: i32, %arg1: i32) -> (i32, i32, i32, i32, i32) {
    %c0_i32 = arith.constant 0 : i32
    %c0_i32_0 = arith.constant 0 : i32
    %c0_i32_1 = arith.constant 0 : i32
    %c0_i32_2 = arith.constant 0 : i32
    return %arg0, %arg1, %c0_i32, %c0_i32_0, %c0_i32_1 : i32, i32, i32, i32, i32
  }
}

</mosaic_0001>

<llo_original>
// kernel: tpu_custom_call.1
$region0: #{tpu_custom_call.1}
  #allocation0 [shape = 'u32[]', space=smem, size = 0x4, offset = 0x4, fixed_abs, tag = 'smem constant byte address 0x4 - core index']
  #allocation1 [shape = 'u32[144,128]{1,0:T(1,128)}', space=vmem, size = 0x12000, scoped, tag = 'internal scratch']
  %s0 = inlined_call_operand.vmem [shape: f32[2,8,8,8,4], index: 0, kind: input, shape index: {}]
  %s1 = inlined_call_operand.vmem [shape: bf16[4,24], index: 1, kind: input, shape index: {}]
  %s2 = inlined_call_operand.vmem [shape: f32[1,24], index: 2, kind: input, shape index: {}]
  %s3 = inlined_call_operand.vmem [shape: f32[1,24], index: 3, kind: input, shape index: {}]
  %s4 = inlined_call_operand.vmem [shape: bf16[2,10,10,10,24], index: 4, kind: output, shape index: {}]
  %s5 = sld [smem:[#allocation0]]
  $region53: #{tpu_custom_call.1} parent=0
    _
  %s7 = ssub.s32 1, %s5
  %s8 = scalar_select 0, %s7, %s5
  loop: start=0, step=1, limit=22
  $region2: #{tpu_custom_call.1} parent=0 // loop_pre_header
    _
  $region3: #{tpu_custom_call.1} parent=0 // loop_header
    %s10 = sphi 0, %s14
    %p11 = scmp.ge.s32.totalorder %s10, 22
    %s17 = sphi 0, %s29
    %s18 = sphi 0, %s25
    %s19 = sphi 0, %s17
    %s20 = sphi 0, %s18
    %s21 = sphi 0, %s19
    %s22 = sphi 0, %s20
    %s44 = sphi 0, %s46
    %s47 = sphi 0, %s44
    %s48 = sphi 0, %s47
    %s64 = sphi 0, %s48
    %s68 = sphi 0, %s68
    %s70 = sphi 0, %s68
    %s71 = sphi 0, %s70
    %s85 = sphi 0, %s71
    %s89 = sphi 0, %s89
    %s91 = sphi 0, %s89
    %s92 = sphi 0, %s91
    %s106 = sphi 0, %s92
    %s110 = sphi 0, %s110
    %s112 = sphi 0, %s110
    %s113 = sphi 0, %s112
    %s127 = sphi 0, %s113
    %s135 = sphi 0, %s137
    %s138 = sphi 0, %s135
    %s139 = sphi 0, %s138
    %s155 = sphi 0, %s139
  $region4: #{tpu_custom_call.1} parent=0 // loop_header_branch
    %13 = sbr.rel (%p11) target = $region8
  $region5: #{tpu_custom_call.1} parent=0 // loop_body
    %s15 = ssub.s32 %s10, 1
    %s16 = ssub.s32 %s10, 2
    %s23 = sadd.s32 1, %s18
    %p24 = scmp.ge.s32.totalorder %s23, 10
    %s25 = scalar_select %p24, 0, %s23
    %s26 = sadd.s32 1, %s17
    %s27 = scalar_select %p24, %s26, %s17
    %p28 = scmp.ge.s32.totalorder %s27, 2
    %s29 = scalar_select %p28, 0, %s27
    %s30 = ssub.s32 %s18, 1
    %p31 = scmp.lt.s32.totalorder %s30, 7
    %s32 = scalar_select %p31, %s30, 7
    %p33 = scmp.gt.s32.totalorder %s32, 0
    %s34 = scalar_select %p33, %s32, 0
    %s35 = ssub.s32 %s25, 1
    %p36 = scmp.lt.s32.totalorder %s35, 7
    %s37 = scalar_select %p36, %s35, 7
    %p38 = scmp.gt.s32.totalorder %s37, 0
    %s39 = scalar_select %p38, %s37, 0
    %s40 = ssub.s32 %s17, %s29
    %s41 = ssub.s32 %s34, %s39
    %s42 = sor.u32 %s40, %s41
    %p43 = scmp.eq.s32.totalorder %s42, 0
    %s45 = sadd.s32 %s44, 1
    %s46 = scalar_select %p43, %s44, %s45
    %p49 = pneg %p43
    %p50 = scmp.eq.s32.totalorder %s10, 19
    %p51 = por %p49, %p50
    %p52 = scmp.ne.s32.totalorder %s44, %s47
    %p53 = scmp.eq.s32.totalorder %s10, 0
    %p54 = por %p52, %p53
    %p55 = scmp.ne.s32.totalorder %s44, %s47
    %p56 = scmp.eq.s32.totalorder %s15, 19
    %p57 = por %p55, %p56
    %p58 = scmp.ne.s32.totalorder %s47, %s48
    %p59 = scmp.eq.s32.totalorder %s15, 0
    %p60 = por %p58, %p59
    %p61 = scmp.ne.s32.totalorder %s47, %s48
    %p62 = scmp.eq.s32.totalorder %s16, 19
    %p63 = por %p61, %p62
    %p65 = scmp.ne.s32.totalorder %s48, %s64
    %p66 = scmp.eq.s32.totalorder %s16, 0
    %p67 = por %p65, %p66
    %s69 = sadd.s32 %s68, 1
    %p72 = scmp.eq.s32.totalorder %s10, 19
    %p73 = scmp.ne.s32.totalorder %s68, %s70
    %p74 = scmp.eq.s32.totalorder %s10, 0
    %p75 = por %p73, %p74
    %p76 = scmp.ne.s32.totalorder %s68, %s70
    %p77 = scmp.eq.s32.totalorder %s15, 19
    %p78 = por %p76, %p77
    %p79 = scmp.ne.s32.totalorder %s70, %s71
    %p80 = scmp.eq.s32.totalorder %s15, 0
    %p81 = por %p79, %p80
    %p82 = scmp.ne.s32.totalorder %s70, %s71
    %p83 = scmp.eq.s32.totalorder %s16, 19
    %p84 = por %p82, %p83
    %p86 = scmp.ne.s32.totalorder %s71, %s85
    %p87 = scmp.eq.s32.totalorder %s16, 0
    %p88 = por %p86, %p87
    %s90 = sadd.s32 %s89, 1
    %p93 = scmp.eq.s32.totalorder %s10, 19
    %p94 = scmp.ne.s32.totalorder %s89, %s91
    %p95 = scmp.eq.s32.totalorder %s10, 0
    %p96 = por %p94, %p95
    %p97 = scmp.ne.s32.totalorder %s89, %s91
    %p98 = scmp.eq.s32.totalorder %s15, 19
    %p99 = por %p97, %p98
    %p100 = scmp.ne.s32.totalorder %s91, %s92
    %p101 = scmp.eq.s32.totalorder %s15, 0
    %p102 = por %p100, %p101
    %p103 = scmp.ne.s32.totalorder %s91, %s92
    %p104 = scmp.eq.s32.totalorder %s16, 19
    %p105 = por %p103, %p104
    %p107 = scmp.ne.s32.totalorder %s92, %s106
    %p108 = scmp.eq.s32.totalorder %s16, 0
    %p109 = por %p107, %p108
    %s111 = sadd.s32 %s110, 1
    %p114 = scmp.eq.s32.totalorder %s10, 19
    %p115 = scmp.ne.s32.totalorder %s110, %s112
    %p116 = scmp.eq.s32.totalorder %s10, 0
    %p117 = por %p115, %p116
    %p118 = scmp.ne.s32.totalorder %s110, %s112
    %p119 = scmp.eq.s32.totalorder %s15, 19
    %p120 = por %p118, %p119
    %p121 = scmp.ne.s32.totalorder %s112, %s113
    %p122 = scmp.eq.s32.totalorder %s15, 0
    %p123 = por %p121, %p122
    %p124 = scmp.ne.s32.totalorder %s112, %s113
    %p125 = scmp.eq.s32.totalorder %s16, 19
    %p126 = por %p124, %p125
    %p128 = scmp.ne.s32.totalorder %s113, %s127
    %p129 = scmp.eq.s32.totalorder %s16, 0
    %p130 = por %p128, %p129
    %s131 = ssub.s32 %s17, %s29
    %s132 = ssub.s32 %s18, %s25
    %s133 = sor.u32 %s131, %s132
    %p134 = scmp.eq.s32.totalorder %s133, 0
    %s136 = sadd.s32 %s135, 1
    %s137 = scalar_select %p134, %s135, %s136
    %p140 = pneg %p134
    %p141 = scmp.eq.s32.totalorder %s10, 19
    %p142 = por %p140, %p141
    %p143 = scmp.ne.s32.totalorder %s135, %s138
    %p144 = scmp.eq.s32.totalorder %s10, 0
    %p145 = por %p143, %p144
    %p146 = scmp.ne.s32.totalorder %s135, %s138
    %p147 = scmp.eq.s32.totalorder %s15, 19
    %p148 = por %p146, %p147
    %p149 = scmp.ne.s32.totalorder %s138, %s139
    %p150 = scmp.eq.s32.totalorder %s15, 0
    %p151 = por %p149, %p150
    %p152 = scmp.ne.s32.totalorder %s138, %s139
    %p153 = scmp.eq.s32.totalorder %s16, 19
    %p154 = por %p152, %p153
    %p156 = scmp.ne.s32.totalorder %s139, %s155
    %p157 = scmp.eq.s32.totalorder %s16, 0
    %p158 = por %p156, %p157
    %p159 = scmp.le.s32.totalorder 1, %s10
    %p160 = scmp.lt.s32.totalorder %s10, 21
    %p161 = pnand %p159, %p160
    %p162 = pneg %p161
    // Predicated region
    $region9: #{tpu_custom_call.1} parent=5 // pred_check
      _
    $region10: #{tpu_custom_call.1} parent=5 // pred_check_branch
      %164 = sbr.rel (%p161) target = $region12
    $region11: #{tpu_custom_call.1} parent=5 // pred_region
      %s165 = ssub.s32 %s10, 1
      // Predicated region
      $region13: #{tpu_custom_call.1} parent=11 // pred_check
        %p166 = pneg %p81
      $region14: #{tpu_custom_call.1} parent=11 // pred_check_branch
        %168 = sbr.rel (%p166) target = $region16
      $region15: #{tpu_custom_call.1} parent=11 // pred_region
        _
      $region16: #{tpu_custom_call.1} parent=11 // pred_fallthru
        _
      // Predicated region
      $region17: #{tpu_custom_call.1} parent=11 // pred_check
        %p169 = pneg %p102
      $region18: #{tpu_custom_call.1} parent=11 // pred_check_branch
        %171 = sbr.rel (%p169) target = $region20
      $region19: #{tpu_custom_call.1} parent=11 // pred_region
        _
      $region20: #{tpu_custom_call.1} parent=11 // pred_fallthru
        _
      // Predicated region
      $region21: #{tpu_custom_call.1} parent=11 // pred_check
        %p172 = pneg %p123
      $region22: #{tpu_custom_call.1} parent=11 // pred_check_branch
        %174 = sbr.rel (%p172) target = $region24
      $region23: #{tpu_custom_call.1} parent=11 // pred_region
        _
      $region24: #{tpu_custom_call.1} parent=11 // pred_fallthru
        _
    $region12: #{tpu_custom_call.1} parent=5 // pred_fallthru
      _
    %p175 = scmp.lt.s32.totalorder %s10, 20
    // Predicated region
    $region25: #{tpu_custom_call.1} parent=5 // pred_check
      %p176 = pneg %p175
    $region26: #{tpu_custom_call.1} parent=5 // pred_check_branch
      %178 = sbr.rel (%p176) target = $region28
    $region27: #{tpu_custom_call.1} parent=5 // pred_region
      // Predicated region
      $region29: #{tpu_custom_call.1} parent=27 // pred_check
        %p179 = pneg %p54
      $region30: #{tpu_custom_call.1} parent=27 // pred_check_branch
        %181 = sbr.rel (%p179) target = $region32
      $region31: #{tpu_custom_call.1} parent=27 // pred_region
        %s182 = ssub.s32 %s18, 1
        %p183 = scmp.lt.s32.totalorder %s182, 7
        %s184 = scalar_select %p183, %s182, 7
        %p185 = scmp.gt.s32.totalorder %s184, 0
        %s186 = scalar_select %p185, %s184, 0
        %p187 = scmp.lt.s32.totalorder %s17, 1
        %s188 = scalar_select %p187, %s17, 1
        %p189 = scmp.lt.s32.totalorder %s186, 7
        %s190 = scalar_select %p189, %s186, 7
        %s191 = smul.addr %s190, 8
        %s192 = smul.addr %s188, 64
        %s193 = sadd.s32 %s191, %s192
        %s194 = smul.addr %s193, 8
        %s195 = scalar_lea.vmem %s0, %s194
        %s196 = ssub.s32 %s18, 1
        %p197 = scmp.lt.s32.totalorder %s196, 7
        %s198 = scalar_select %p197, %s196, 7
        %p199 = scmp.gt.s32.totalorder %s198, 0
        %s200 = scalar_select %p199, %s198, 0
      $region32: #{tpu_custom_call.1} parent=27 // pred_fallthru
        _
    $region28: #{tpu_custom_call.1} parent=5 // pred_fallthru
      _
    %p201 = scmp.le.s32.totalorder 1, %s10
    %p202 = scmp.lt.s32.totalorder %s10, 21
    %p203 = pnand %p201, %p202
    %p204 = pneg %p203
    // Predicated region
    $region33: #{tpu_custom_call.1} parent=5 // pred_check
      _
    $region34: #{tpu_custom_call.1} parent=5 // pred_check_branch
      %206 = sbr.rel (%p203) target = $region36
    $region35: #{tpu_custom_call.1} parent=5 // pred_region
      %s207 = ssub.s32 %s10, 1
      %s208 = ssub.s32 %s20, 1
      %p209 = scmp.lt.s32.totalorder %s208, 7
      %s210 = scalar_select %p209, %s208, 7
      %p211 = scmp.gt.s32.totalorder %s210, 0
      %s212 = scalar_select %p211, %s210, 0
      %p213 = scmp.lt.s32.totalorder %s19, 1
      %s214 = scalar_select %p213, %s19, 1
      %p215 = scmp.lt.s32.totalorder %s212, 7
      %s216 = scalar_select %p215, %s212, 7
      %s217 = smul.addr %s216, 8
      %s218 = smul.addr %s214, 64
      %s219 = sadd.s32 %s217, %s218
      %s220 = smul.addr %s219, 8
      %s221 = scalar_lea.vmem %s0, %s220
      %p222 = pneg %p60
      %p223 = pneg %p57
      %p224 = pneg %p81
      %p225 = pneg %p78
      %p226 = pneg %p102
      %p227 = pneg %p99
      %p228 = pneg %p123
      %p229 = pneg %p120
      %p230 = pneg %p151
      %p231 = pneg %p148
      %p232 = scmp.lt.s32.totalorder %s19, 1
      %s233 = scalar_select %p232, %s19, 1
      %p234 = scmp.lt.s32.totalorder %s20, 9
      %s235 = scalar_select %p234, %s20, 9
      %s236 = smul.addr %s235, 20
      %s237 = smul.addr %s233, 200
      %s238 = sadd.s32 %s236, %s237
      %s239 = smul.addr %s238, 4
      %s240 = scalar_lea.vmem %s4, %s239
      %s241 = ssub.s32 %s20, 1
      %p242 = scmp.lt.s32.totalorder %s241, 7
      %s243 = scalar_select %p242, %s241, 7
      %p244 = scmp.gt.s32.totalorder %s243, 0
      %s245 = scalar_select %p244, %s243, 0
      %p246 = scmp.lt.s32.totalorder %s19, 1
      %s247 = scalar_select %p246, %s19, 1
      %p248 = scmp.lt.s32.totalorder %s245, 7
      %s249 = scalar_select %p248, %s245, 7
      %s250 = smul.addr %s249, 8
      %s251 = smul.addr %s247, 64
      %s252 = sadd.s32 %s250, %s251
      %s253 = smul.addr %s252, 8
      %s254 = scalar_lea.vmem %s0, %s253
      %s255 = ssub.s32 %s20, 1
      %p256 = scmp.lt.s32.totalorder %s255, 7
      %s257 = scalar_select %p256, %s255, 7
      %p258 = scmp.gt.s32.totalorder %s257, 0
      %s259 = scalar_select %p258, %s257, 0
      %p260 = scmp.lt.s32.totalorder %s19, 1
      %s261 = scalar_select %p260, %s19, 1
      %p262 = scmp.lt.s32.totalorder %s20, 9
      %s263 = scalar_select %p262, %s20, 9
      %s264 = smul.addr %s263, 20
      %s265 = smul.addr %s261, 200
      %s266 = sadd.s32 %s264, %s265
      %s267 = smul.addr %s266, 4
      %s268 = scalar_lea.vmem %s4, %s267
      %vm270 = vcmask 191488
      %271 = vst.msk [vmem:[%s268] sm:$0xf] %vm270, 0
      %vm272 = vcmask 188416
      %273 = vst.msk [vmem:[%s268 + $0x4] sm:$0x1] %vm272, 0
      %274 = vst.msk [vmem:[%s268 + $0x8] sm:$0xf] %vm270, 0
      %275 = vst.msk [vmem:[%s268 + $0xc] sm:$0x1] %vm272, 0
      %276 = vst.msk [vmem:[%s268 + $0x10] sm:$0xf] %vm270, 0
      %277 = vst.msk [vmem:[%s268 + $0x14] sm:$0x1] %vm272, 0
      %278 = vst.msk [vmem:[%s268 + $0x18] sm:$0xf] %vm270, 0
      %279 = vst.msk [vmem:[%s268 + $0x1c] sm:$0x1] %vm272, 0
      %280 = vst.msk [vmem:[%s268 + $0x20] sm:$0xf] %vm270, 0
      %281 = vst.msk [vmem:[%s268 + $0x24] sm:$0x1] %vm272, 0
      %282 = vst.msk [vmem:[%s268 + $0x28] sm:$0xf] %vm270, 0
      %283 = vst.msk [vmem:[%s268 + $0x2c] sm:$0x1] %vm272, 0
      %284 = vst.msk [vmem:[%s268 + $0x30] sm:$0xf] %vm270, 0
      %285 = vst.msk [vmem:[%s268 + $0x34] sm:$0x1] %vm272, 0
      %286 = vst.msk [vmem:[%s268 + $0x38] sm:$0xf] %vm270, 0
      %287 = vst.msk [vmem:[%s268 + $0x3c] sm:$0x1] %vm272, 0
      %288 = vst.msk [vmem:[%s268 + $0x40] sm:$0xf] %vm270, 0
      %289 = vst.msk [vmem:[%s268 + $0x44] sm:$0x1] %vm272, 0
      %290 = vst.msk [vmem:[%s268 + $0x48] sm:$0xf] %vm270, 0
      %291 = vst.msk [vmem:[%s268 + $0x4c] sm:$0x1] %vm272, 0
      %p292 = scmp.ge.s32.totalorder %s20, 1
      %p293 = scmp.lt.s32.totalorder %s20, 9
      %p294 = pnand %p292, %p293
      %p295 = pneg %p294
      // Predicated region
      $region37: #{tpu_custom_call.1} parent=35 // pred_check
        _
      $region38: #{tpu_custom_call.1} parent=35 // pred_check_branch
        %297 = sbr.rel (%p294) target = $region40
      $region39: #{tpu_custom_call.1} parent=35 // pred_region
        %v298 = vld [vmem:[%s2] sm:$0x1]
        %v299 = vld [vmem:[%s3] sm:$0x1]
        %v300 = vld [vmem:[%s254] sm:$0xff]
        %v301 = vpack.c.bf16 %v300, %v300
        %v302 = vld [vmem:[%s1] sm:$0x3]
        %vm303 = vcmask 31744
        %v305 = vsel %vm303, %v301, 0
        %vm307 = vcmask 1041408
        %v309 = vsel %vm307, %v302, 0
        %311 = vmatprep.subr.bf16.mxu0 0
        %312 = vmatpush1.bf16.msra.mxu0 %v309
        %313 = vmatprep.subr.bf16.mxu0 0
        %314 = vmatpush1.bf16.msra.mxu0 0
        %315 = vmatprep.subr.bf16.mxu0 0
        %316 = vmatpush1.bf16.msra.mxu0 0
        %317 = vmatprep.subr.bf16.mxu0 0
        %318 = vmatpush1.bf16.msra.mxu0 0
        %319 = vmatprep.subr.bf16.mxu0 0
        %320 = vmatpush1.bf16.msra.mxu0 0
        %321 = vmatprep.subr.bf16.mxu0 0
        %322 = vmatpush1.bf16.msra.mxu0 0
        %323 = vmatprep.subr.bf16.mxu0 0
        %324 = vmatpush1.bf16.msra.mxu0 0
        %325 = vmatprep.subr.bf16.mxu0 0
        %326 = vmatpush1.bf16.msra.mxu0 0
        %327 = vmatprep.subr.bf16.mxu0 0
        %328 = vmatpush1.bf16.msra.mxu0 0
        %329 = vmatprep.subr.bf16.mxu0 0
        %330 = vmatpush1.bf16.msra.mxu0 0
        %331 = vmatprep.subr.bf16.mxu0 0
        %332 = vmatpush1.bf16.msra.mxu0 0
        %333 = vmatprep.subr.bf16.mxu0 0
        %334 = vmatpush1.bf16.msra.mxu0 0
        %335 = vmatprep.subr.bf16.mxu0 0
        %336 = vmatpush1.bf16.msra.mxu0 0
        %337 = vmatprep.subr.bf16.mxu0 0
        %338 = vmatpush1.bf16.msra.mxu0 0
        %339 = vmatprep.subr.bf16.mxu0 0
        %340 = vmatpush1.bf16.msra.mxu0 0
        %341 = vmatprep.subr.bf16.mxu0 0
        %342 = vmatpush1.bf16.msra.mxu0 0
        %343 = vmatprep.mubr.bf16.mxu0 0
        %344 = vmatmul.mubr.bf16.gmra.mrb[0].mxu0 %v305
        %v345 = vpop.f32.mrb[0].mxu0
        %v346 = vadd.f32 0.0, %v345
        %v347 = vpop.f32.mrb[0].mxu0
        %v348 = vpop.f32.mrb[0].mxu0
        %v349 = vpop.f32.mrb[0].mxu0
        %350 = vdwg.mxu0
        %v352 = vlaneseq
        %v353 = vshrl.u32 %v352, 7
        %v354 = vsub.s32 0, %v353
        %v355 = vrot.slane %v298, %v354
        %v357 = vmul.f32 %v346, %v355
        %v359 = vlaneseq
        %v360 = vshrl.u32 %v359, 7
        %v361 = vsub.s32 0, %v360
        %v362 = vrot.slane %v299, %v361
        %v364 = vadd.f32 %v357, %v362
        %v365 = vmax.f32 %v364, 0.0
        %v366 = vpack.c.bf16 %v365, %v365
        %v368 = vunpack.c.l.b16 %v366
        %v369 = vpack.c.b16 %v368, %v368
        %v371 = vshrl.u32 %v369, 16
        %v373 = vrot.slane %v371, 7
        %v374 = vshll.u32 %v369, 16
        %v376 = vor.u32 %v373, %v374
        %v377 = vrot.slane %v373, 4
        %s380 = scalar_lea.vmem %s268, 8
        %vm381 = vcmask 191488
        %vm382 = vsmask.f32 7938
        %vm383 = vmand %vm381, %vm382
        %v384 = vld [vmem:[%s380] sm:$0xf]
        %v385 = vsel %vm383, %v376, %v384
        %386 = vst [vmem:[%s380] sm:$0xf] %v385
        %vm387 = vcmask 188416
        %vm388 = vsmask.f32 256
        %vm389 = vmand %vm387, %vm388
        %v390 = vld [vmem:[%s380 + $0x4] sm:$0x1]
        %v391 = vsel %vm389, %v377, %v390
        %392 = vst [vmem:[%s380 + $0x4] sm:$0x1] %v391
        %s393 = scalar_lea.vmem %s254, 8
        %v394 = vld [vmem:[%s393] sm:$0xff]
        %v395 = vpack.c.bf16 %v394, %v394
        %v396 = vld [vmem:[%s1] sm:$0x3]
        %v398 = vsel %vm303, %v395, 0
        %v401 = vsel %vm307, %v396, 0
        %403 = vmatprep.subr.bf16.mxu0 0
        %404 = vmatpush1.bf16.msra.mxu0 %v401
        %405 = vmatprep.subr.bf16.mxu0 0
        %406 = vmatpush1.bf16.msra.mxu0 0
        %407 = vmatprep.subr.bf16.mxu0 0
        %408 = vmatpush1.bf16.msra.mxu0 0
        %409 = vmatprep.subr.bf16.mxu0 0
        %410 = vmatpush1.bf16.msra.mxu0 0
        %411 = vmatprep.subr.bf16.mxu0 0
        %412 = vmatpush1.bf16.msra.mxu0 0
        %413 = vmatprep.subr.bf16.mxu0 0
        %414 = vmatpush1.bf16.msra.mxu0 0
        %415 = vmatprep.subr.bf16.mxu0 0
        %416 = vmatpush1.bf16.msra.mxu0 0
        %417 = vmatprep.subr.bf16.mxu0 0
        %418 = vmatpush1.bf16.msra.mxu0 0
        %419 = vmatprep.subr.bf16.mxu0 0
        %420 = vmatpush1.bf16.msra.mxu0 0
        %421 = vmatprep.subr.bf16.mxu0 0
        %422 = vmatpush1.bf16.msra.mxu0 0
        %423 = vmatprep.subr.bf16.mxu0 0
        %424 = vmatpush1.bf16.msra.mxu0 0
        %425 = vmatprep.subr.bf16.mxu0 0
        %426 = vmatpush1.bf16.msra.mxu0 0
        %427 = vmatprep.subr.bf16.mxu0 0
        %428 = vmatpush1.bf16.msra.mxu0 0
        %429 = vmatprep.subr.bf16.mxu0 0
        %430 = vmatpush1.bf16.msra.mxu0 0
        %431 = vmatprep.subr.bf16.mxu0 0
        %432 = vmatpush1.bf16.msra.mxu0 0
        %433 = vmatprep.subr.bf16.mxu0 0
        %434 = vmatpush1.bf16.msra.mxu0 0
        %435 = vmatprep.mubr.bf16.mxu0 0
        %436 = vmatmul.mubr.bf16.gmra.mrb[0].mxu0 %v398
        %v437 = vpop.f32.mrb[0].mxu0
        %v438 = vadd.f32 0.0, %v437
        %v439 = vpop.f32.mrb[0].mxu0
        %v440 = vpop.f32.mrb[0].mxu0
        %v441 = vpop.f32.mrb[0].mxu0
        %442 = vdwg.mxu0
        %v443 = vmul.f32 %v438, %v355
        %v444 = vadd.f32 %v443, %v362
        %v445 = vmax.f32 %v444, 0.0
        %v446 = vpack.c.bf16 %v445, %v445
        %v448 = vunpack.c.l.b16 %v446
        %v449 = vpack.c.b16 %v448, %v448
        %v451 = vshrl.u32 %v449, 16
        %v453 = vrot.slane %v451, 7
        %v454 = vshll.u32 %v449, 16
        %v456 = vor.u32 %v453, %v454
        %v457 = vrot.slane %v453, 4
        %s460 = scalar_lea.vmem %s268, 16
        %v461 = vld [vmem:[%s460] sm:$0xf]
        %v462 = vsel %vm383, %v456, %v461
        %463 = vst [vmem:[%s460] sm:$0xf] %v462
        %v464 = vld [vmem:[%s460 + $0x4] sm:$0x1]
        %v465 = vsel %vm389, %v457, %v464
        %466 = vst [vmem:[%s460 + $0x4] sm:$0x1] %v465
        %s467 = scalar_lea.vmem %s254, 16
        %v468 = vld [vmem:[%s467] sm:$0xff]
        %v469 = vpack.c.bf16 %v468, %v468
        %v470 = vld [vmem:[%s1] sm:$0x3]
        %v472 = vsel %vm303, %v469, 0
        %v475 = vsel %vm307, %v470, 0
        %477 = vmatprep.subr.bf16.mxu0 0
        %478 = vmatpush1.bf16.msra.mxu0 %v475
        %479 = vmatprep.subr.bf16.mxu0 0
        %480 = vmatpush1.bf16.msra.mxu0 0
        %481 = vmatprep.subr.bf16.mxu0 0
        %482 = vmatpush1.bf16.msra.mxu0 0
        %483 = vmatprep.subr.bf16.mxu0 0
        %484 = vmatpush1.bf16.msra.mxu0 0
        %485 = vmatprep.subr.bf16.mxu0 0
        %486 = vmatpush1.bf16.msra.mxu0 0
        %487 = vmatprep.subr.bf16.mxu0 0
        %488 = vmatpush1.bf16.msra.mxu0 0
        %489 = vmatprep.subr.bf16.mxu0 0
        %490 = vmatpush1.bf16.msra.mxu0 0
        %491 = vmatprep.subr.bf16.mxu0 0
        %492 = vmatpush1.bf16.msra.mxu0 0
        %493 = vmatprep.subr.bf16.mxu0 0
        %494 = vmatpush1.bf16.msra.mxu0 0
        %495 = vmatprep.subr.bf16.mxu0 0
        %496 = vmatpush1.bf16.msra.mxu0 0
        %497 = vmatprep.subr.bf16.mxu0 0
        %498 = vmatpush1.bf16.msra.mxu0 0
        %499 = vmatprep.subr.bf16.mxu0 0
        %500 = vmatpush1.bf16.msra.mxu0 0
        %501 = vmatprep.subr.bf16.mxu0 0
        %502 = vmatpush1.bf16.msra.mxu0 0
        %503 = vmatprep.subr.bf16.mxu0 0
        %504 = vmatpush1.bf16.msra.mxu0 0
        %505 = vmatprep.subr.bf16.mxu0 0
        %506 = vmatpush1.bf16.msra.mxu0 0
        %507 = vmatprep.subr.bf16.mxu0 0
        %508 = vmatpush1.bf16.msra.mxu0 0
        %509 = vmatprep.mubr.bf16.mxu0 0
        %510 = vmatmul.mubr.bf16.gmra.mrb[0].mxu0 %v472
        %v511 = vpop.f32.mrb[0].mxu0
        %v512 = vadd.f32 0.0, %v511
        %v513 = vpop.f32.mrb[0].mxu0
        %v514 = vpop.f32.mrb[0].mxu0
        %v515 = vpop.f32.mrb[0].mxu0
        %516 = vdwg.mxu0
        %v517 = vmul.f32 %v512, %v355
        %v518 = vadd.f32 %v517, %v362
        %v519 = vmax.f32 %v518, 0.0
        %v520 = vpack.c.bf16 %v519, %v519
        %v522 = vunpack.c.l.b16 %v520
        %v523 = vpack.c.b16 %v522, %v522
        %v525 = vshrl.u32 %v523, 16
        %v527 = vrot.slane %v525, 7
        %v528 = vshll.u32 %v523, 16
        %v530 = vor.u32 %v527, %v528
        %v531 = vrot.slane %v527, 4
        %s534 = scalar_lea.vmem %s268, 24
        %v535 = vld [vmem:[%s534] sm:$0xf]
        %v536 = vsel %vm383, %v530, %v535
        %537 = vst [vmem:[%s534] sm:$0xf] %v536
        %v538 = vld [vmem:[%s534 + $0x4] sm:$0x1]
        %v539 = vsel %vm389, %v531, %v538
        %540 = vst [vmem:[%s534 + $0x4] sm:$0x1] %v539
        %s541 = scalar_lea.vmem %s254, 24
        %v542 = vld [vmem:[%s541] sm:$0xff]
        %v543 = vpack.c.bf16 %v542, %v542
        %v544 = vld [vmem:[%s1] sm:$0x3]
        %v546 = vsel %vm303, %v543, 0
        %v549 = vsel %vm307, %v544, 0
        %551 = vmatprep.subr.bf16.mxu0 0
        %552 = vmatpush1.bf16.msra.mxu0 %v549
        %553 = vmatprep.subr.bf16.mxu0 0
        %554 = vmatpush1.bf16.msra.mxu0 0
        %555 = vmatprep.subr.bf16.mxu0 0
        %556 = vmatpush1.bf16.msra.mxu0 0
        %557 = vmatprep.subr.bf16.mxu0 0
        %558 = vmatpush1.bf16.msra.mxu0 0
        %559 = vmatprep.subr.bf16.mxu0 0
        %560 = vmatpush1.bf16.msra.mxu0 0
        %561 = vmatprep.subr.bf16.mxu0 0
        %562 = vmatpush1.bf16.msra.mxu0 0
        %563 = vmatprep.subr.bf16.mxu0 0
        %564 = vmatpush1.bf16.msra.mxu0 0
        %565 = vmatprep.subr.bf16.mxu0 0
        %566 = vmatpush1.bf16.msra.mxu0 0
        %567 = vmatprep.subr.bf16.mxu0 0
        %568 = vmatpush1.bf16.msra.mxu0 0
        %569 = vmatprep.subr.bf16.mxu0 0
        %570 = vmatpush1.bf16.msra.mxu0 0
        %571 = vmatprep.subr.bf16.mxu0 0
        %572 = vmatpush1.bf16.msra.mxu0 0
        %573 = vmatprep.subr.bf16.mxu0 0
        %574 = vmatpush1.bf16.msra.mxu0 0
        %575 = vmatprep.subr.bf16.mxu0 0
        %576 = vmatpush1.bf16.msra.mxu0 0
        %577 = vmatprep.subr.bf16.mxu0 0
        %578 = vmatpush1.bf16.msra.mxu0 0
        %579 = vmatprep.subr.bf16.mxu0 0
        %580 = vmatpush1.bf16.msra.mxu0 0
        %581 = vmatprep.subr.bf16.mxu0 0
        %582 = vmatpush1.bf16.msra.mxu0 0
        %583 = vmatprep.mubr.bf16.mxu0 0
        %584 = vmatmul.mubr.bf16.gmra.mrb[0].mxu0 %v546
        %v585 = vpop.f32.mrb[0].mxu0
        %v586 = vadd.f32 0.0, %v585
        %v587 = vpop.f32.mrb[0].mxu0
        %v588 = vpop.f32.mrb[0].mxu0
        %v589 = vpop.f32.mrb[0].mxu0
        %590 = vdwg.mxu0
        %v591 = vmul.f32 %v586, %v355
        %v592 = vadd.f32 %v591, %v362
        %v593 = vmax.f32 %v592, 0.0
        %v594 = vpack.c.bf16 %v593, %v593
        %v596 = vunpack.c.l.b16 %v594
        %v597 = vpack.c.b16 %v596, %v596
        %v599 = vshrl.u32 %v597, 16
        %v601 = vrot.slane %v599, 7
        %v602 = vshll.u32 %v597, 16
        %v604 = vor.u32 %v601, %v602
        %v605 = vrot.slane %v601, 4
        %s608 = scalar_lea.vmem %s268, 32
        %v609 = vld [vmem:[%s608] sm:$0xf]
        %v610 = vsel %vm383, %v604, %v609
        %611 = vst [vmem:[%s608] sm:$0xf] %v610
        %v612 = vld [vmem:[%s608 + $0x4] sm:$0x1]
        %v613 = vsel %vm389, %v605, %v612
        %614 = vst [vmem:[%s608 + $0x4] sm:$0x1] %v613
        %s615 = scalar_lea.vmem %s254, 32
        %v616 = vld [vmem:[%s615] sm:$0xff]
        %v617 = vpack.c.bf16 %v616, %v616
        %v618 = vld [vmem:[%s1] sm:$0x3]
        %v620 = vsel %vm303, %v617, 0
        %v623 = vsel %vm307, %v618, 0
        %625 = vmatprep.subr.bf16.mxu0 0
        %626 = vmatpush1.bf16.msra.mxu0 %v623
        %627 = vmatprep.subr.bf16.mxu0 0
        %628 = vmatpush1.bf16.msra.mxu0 0
        %629 = vmatprep.subr.bf16.mxu0 0
        %630 = vmatpush1.bf16.msra.mxu0 0
        %631 = vmatprep.subr.bf16.mxu0 0
        %632 = vmatpush1.bf16.msra.mxu0 0
        %633 = vmatprep.subr.bf16.mxu0 0
        %634 = vmatpush1.bf16.msra.mxu0 0
        %635 = vmatprep.subr.bf16.mxu0 0
        %636 = vmatpush1.bf16.msra.mxu0 0
        %637 = vmatprep.subr.bf16.mxu0 0
        %638 = vmatpush1.bf16.msra.mxu0 0
        %639 = vmatprep.subr.bf16.mxu0 0
        %640 = vmatpush1.bf16.msra.mxu0 0
        %641 = vmatprep.subr.bf16.mxu0 0
        %642 = vmatpush1.bf16.msra.mxu0 0
        %643 = vmatprep.subr.bf16.mxu0 0
        %644 = vmatpush1.bf16.msra.mxu0 0
        %645 = vmatprep.subr.bf16.mxu0 0
        %646 = vmatpush1.bf16.msra.mxu0 0
        %647 = vmatprep.subr.bf16.mxu0 0
        %648 = vmatpush1.bf16.msra.mxu0 0
        %649 = vmatprep.subr.bf16.mxu0 0
        %650 = vmatpush1.bf16.msra.mxu0 0
        %651 = vmatprep.subr.bf16.mxu0 0
        %652 = vmatpush1.bf16.msra.mxu0 0
        %653 = vmatprep.subr.bf16.mxu0 0
        %654 = vmatpush1.bf16.msra.mxu0 0
        %655 = vmatprep.subr.bf16.mxu0 0
        %656 = vmatpush1.bf16.msra.mxu0 0
        %657 = vmatprep.mubr.bf16.mxu0 0
        %658 = vmatmul.mubr.bf16.gmra.mrb[0].mxu0 %v620
        %v659 = vpop.f32.mrb[0].mxu0
        %v660 = vadd.f32 0.0, %v659
        %v661 = vpop.f32.mrb[0].mxu0
        %v662 = vpop.f32.mrb[0].mxu0
        %v663 = vpop.f32.mrb[0].mxu0
        %664 = vdwg.mxu0
        %v665 = vmul.f32 %v660, %v355
        %v666 = vadd.f32 %v665, %v362
        %v667 = vmax.f32 %v666, 0.0
        %v668 = vpack.c.bf16 %v667, %v667
        %v670 = vunpack.c.l.b16 %v668
        %v671 = vpack.c.b16 %v670, %v670
        %v673 = vshrl.u32 %v671, 16
        %v675 = vrot.slane %v673, 7
        %v676 = vshll.u32 %v671, 16
        %v678 = vor.u32 %v675, %v676
        %v679 = vrot.slane %v675, 4
        %s682 = scalar_lea.vmem %s268, 40
        %v683 = vld [vmem:[%s682] sm:$0xf]
        %v684 = vsel %vm383, %v678, %v683
        %685 = vst [vmem:[%s682] sm:$0xf] %v684
        %v686 = vld [vmem:[%s682 + $0x4] sm:$0x1]
        %v687 = vsel %vm389, %v679, %v686
        %688 = vst [vmem:[%s682 + $0x4] sm:$0x1] %v687
        %s689 = scalar_lea.vmem %s254, 40
        %v690 = vld [vmem:[%s689] sm:$0xff]
        %v691 = vpack.c.bf16 %v690, %v690
        %v692 = vld [vmem:[%s1] sm:$0x3]
        %v694 = vsel %vm303, %v691, 0
        %v697 = vsel %vm307, %v692, 0
        %699 = vmatprep.subr.bf16.mxu0 0
        %700 = vmatpush1.bf16.msra.mxu0 %v697
        %701 = vmatprep.subr.bf16.mxu0 0
        %702 = vmatpush1.bf16.msra.mxu0 0
        %703 = vmatprep.subr.bf16.mxu0 0
        %704 = vmatpush1.bf16.msra.mxu0 0
        %705 = vmatprep.subr.bf16.mxu0 0
        %706 = vmatpush1.bf16.msra.mxu0 0
        %707 = vmatprep.subr.bf16.mxu0 0
        %708 = vmatpush1.bf16.msra.mxu0 0
        %709 = vmatprep.subr.bf16.mxu0 0
        %710 = vmatpush1.bf16.msra.mxu0 0
        %711 = vmatprep.subr.bf16.mxu0 0
        %712 = vmatpush1.bf16.msra.mxu0 0
        %713 = vmatprep.subr.bf16.mxu0 0
        %714 = vmatpush1.bf16.msra.mxu0 0
        %715 = vmatprep.subr.bf16.mxu0 0
        %716 = vmatpush1.bf16.msra.mxu0 0
        %717 = vmatprep.subr.bf16.mxu0 0
        %718 = vmatpush1.bf16.msra.mxu0 0
        %719 = vmatprep.subr.bf16.mxu0 0
        %720 = vmatpush1.bf16.msra.mxu0 0
        %721 = vmatprep.subr.bf16.mxu0 0
        %722 = vmatpush1.bf16.msra.mxu0 0
        %723 = vmatprep.subr.bf16.mxu0 0
        %724 = vmatpush1.bf16.msra.mxu0 0
        %725 = vmatprep.subr.bf16.mxu0 0
        %726 = vmatpush1.bf16.msra.mxu0 0
        %727 = vmatprep.subr.bf16.mxu0 0
        %728 = vmatpush1.bf16.msra.mxu0 0
        %729 = vmatprep.subr.bf16.mxu0 0
        %730 = vmatpush1.bf16.msra.mxu0 0
        %731 = vmatprep.mubr.bf16.mxu0 0
        %732 = vmatmul.mubr.bf16.gmra.mrb[0].mxu0 %v694
        %v733 = vpop.f32.mrb[0].mxu0
        %v734 = vadd.f32 0.0, %v733
        %v735 = vpop.f32.mrb[0].mxu0
        %v736 = vpop.f32.mrb[0].mxu0
        %v737 = vpop.f32.mrb[0].mxu0
        %738 = vdwg.mxu0
        %v739 = vmul.f32 %v734, %v355
        %v740 = vadd.f32 %v739, %v362
        %v741 = vmax.f32 %v740, 0.0
        %v742 = vpack.c.bf16 %v741, %v741
        %v744 = vunpack.c.l.b16 %v742
        %v745 = vpack.c.b16 %v744, %v744
        %v747 = vshrl.u32 %v745, 16
        %v749 = vrot.slane %v747, 7
        %v750 = vshll.u32 %v745, 16
        %v752 = vor.u32 %v749, %v750
        %v753 = vrot.slane %v749, 4
        %s756 = scalar_lea.vmem %s268, 48
        %v757 = vld [vmem:[%s756] sm:$0xf]
        %v758 = vsel %vm383, %v752, %v757
        %759 = vst [vmem:[%s756] sm:$0xf] %v758
        %v760 = vld [vmem:[%s756 + $0x4] sm:$0x1]
        %v761 = vsel %vm389, %v753, %v760
        %762 = vst [vmem:[%s756 + $0x4] sm:$0x1] %v761
        %s763 = scalar_lea.vmem %s254, 48
        %v764 = vld [vmem:[%s763] sm:$0xff]
        %v765 = vpack.c.bf16 %v764, %v764
        %v766 = vld [vmem:[%s1] sm:$0x3]
        %v768 = vsel %vm303, %v765, 0
        %v771 = vsel %vm307, %v766, 0
        %773 = vmatprep.subr.bf16.mxu0 0
        %774 = vmatpush1.bf16.msra.mxu0 %v771
        %775 = vmatprep.subr.bf16.mxu0 0
        %776 = vmatpush1.bf16.msra.mxu0 0
        %777 = vmatprep.subr.bf16.mxu0 0
        %778 = vmatpush1.bf16.msra.mxu0 0
        %779 = vmatprep.subr.bf16.mxu0 0
        %780 = vmatpush1.bf16.msra.mxu0 0
        %781 = vmatprep.subr.bf16.mxu0 0
        %782 = vmatpush1.bf16.msra.mxu0 0
        %783 = vmatprep.subr.bf16.mxu0 0
        %784 = vmatpush1.bf16.msra.mxu0 0
        %785 = vmatprep.subr.bf16.mxu0 0
        %786 = vmatpush1.bf16.msra.mxu0 0
        %787 = vmatprep.subr.bf16.mxu0 0
        %788 = vmatpush1.bf16.msra.mxu0 0
        %789 = vmatprep.subr.bf16.mxu0 0
        %790 = vmatpush1.bf16.msra.mxu0 0
        %791 = vmatprep.subr.bf16.mxu0 0
        %792 = vmatpush1.bf16.msra.mxu0 0
        %793 = vmatprep.subr.bf16.mxu0 0
        %794 = vmatpush1.bf16.msra.mxu0 0
        %795 = vmatprep.subr.bf16.mxu0 0
        %796 = vmatpush1.bf16.msra.mxu0 0
        %797 = vmatprep.subr.bf16.mxu0 0
        %798 = vmatpush1.bf16.msra.mxu0 0
        %799 = vmatprep.subr.bf16.mxu0 0
        %800 = vmatpush1.bf16.msra.mxu0 0
        %801 = vmatprep.subr.bf16.mxu0 0
        %802 = vmatpush1.bf16.msra.mxu0 0
        %803 = vmatprep.subr.bf16.mxu0 0
        %804 = vmatpush1.bf16.msra.mxu0 0
        %805 = vmatprep.mubr.bf16.mxu0 0
        %806 = vmatmul.mubr.bf16.gmra.mrb[0].mxu0 %v768
        %v807 = vpop.f32.mrb[0].mxu0
        %v808 = vadd.f32 0.0, %v807
        %v809 = vpop.f32.mrb[0].mxu0
        %v810 = vpop.f32.mrb[0].mxu0
        %v811 = vpop.f32.mrb[0].mxu0
        %812 = vdwg.mxu0
        %v813 = vmul.f32 %v808, %v355
        %v814 = vadd.f32 %v813, %v362
        %v815 = vmax.f32 %v814, 0.0
        %v816 = vpack.c.bf16 %v815, %v815
        %v818 = vunpack.c.l.b16 %v816
        %v819 = vpack.c.b16 %v818, %v818
        %v821 = vshrl.u32 %v819, 16
        %v823 = vrot.slane %v821, 7
        %v824 = vshll.u32 %v819, 16
        %v826 = vor.u32 %v823, %v824
        %v827 = vrot.slane %v823, 4
        %s830 = scalar_lea.vmem %s268, 56
        %v831 = vld [vmem:[%s830] sm:$0xf]
        %v832 = vsel %vm383, %v826, %v831
        %833 = vst [vmem:[%s830] sm:$0xf] %v832
        %v834 = vld [vmem:[%s830 + $0x4] sm:$0x1]
        %v835 = vsel %vm389, %v827, %v834
        %836 = vst [vmem:[%s830 + $0x4] sm:$0x1] %v835
        %s837 = scalar_lea.vmem %s254, 56
        %v838 = vld [vmem:[%s837] sm:$0xff]
        %v839 = vpack.c.bf16 %v838, %v838
        %v840 = vld [vmem:[%s1] sm:$0x3]
        %v842 = vsel %vm303, %v839, 0
        %v845 = vsel %vm307, %v840, 0
        %847 = vmatprep.subr.bf16.mxu0 0
        %848 = vmatpush1.bf16.msra.mxu0 %v845
        %849 = vmatprep.subr.bf16.mxu0 0
        %850 = vmatpush1.bf16.msra.mxu0 0
        %851 = vmatprep.subr.bf16.mxu0 0
        %852 = vmatpush1.bf16.msra.mxu0 0
        %853 = vmatprep.subr.bf16.mxu0 0
        %854 = vmatpush1.bf16.msra.mxu0 0
        %855 = vmatprep.subr.bf16.mxu0 0
        %856 = vmatpush1.bf16.msra.mxu0 0
        %857 = vmatprep.subr.bf16.mxu0 0
        %858 = vmatpush1.bf16.msra.mxu0 0
        %859 = vmatprep.subr.bf16.mxu0 0
        %860 = vmatpush1.bf16.msra.mxu0 0
        %861 = vmatprep.subr.bf16.mxu0 0
        %862 = vmatpush1.bf16.msra.mxu0 0
        %863 = vmatprep.subr.bf16.mxu0 0
        %864 = vmatpush1.bf16.msra.mxu0 0
        %865 = vmatprep.subr.bf16.mxu0 0
        %866 = vmatpush1.bf16.msra.mxu0 0
        %867 = vmatprep.subr.bf16.mxu0 0
        %868 = vmatpush1.bf16.msra.mxu0 0
        %869 = vmatprep.subr.bf16.mxu0 0
        %870 = vmatpush1.bf16.msra.mxu0 0
        %871 = vmatprep.subr.bf16.mxu0 0
        %872 = vmatpush1.bf16.msra.mxu0 0
        %873 = vmatprep.subr.bf16.mxu0 0
        %874 = vmatpush1.bf16.msra.mxu0 0
        %875 = vmatprep.subr.bf16.mxu0 0
        %876 = vmatpush1.bf16.msra.mxu0 0
        %877 = vmatprep.subr.bf16.mxu0 0
        %878 = vmatpush1.bf16.msra.mxu0 0
        %879 = vmatprep.mubr.bf16.mxu0 0
        %880 = vmatmul.mubr.bf16.gmra.mrb[0].mxu0 %v842
        %v881 = vpop.f32.mrb[0].mxu0
        %v882 = vadd.f32 0.0, %v881
        %v883 = vpop.f32.mrb[0].mxu0
        %v884 = vpop.f32.mrb[0].mxu0
        %v885 = vpop.f32.mrb[0].mxu0
        %886 = vdwg.mxu0
        %v887 = vmul.f32 %v882, %v355
        %v888 = vadd.f32 %v887, %v362
        %v889 = vmax.f32 %v888, 0.0
        %v890 = vpack.c.bf16 %v889, %v889
        %v892 = vunpack.c.l.b16 %v890
        %v893 = vpack.c.b16 %v892, %v892
        %v895 = vshrl.u32 %v893, 16
        %v897 = vrot.slane %v895, 7
        %v898 = vshll.u32 %v893, 16
        %v900 = vor.u32 %v897, %v898
        %v901 = vrot.slane %v897, 4
        %s904 = scalar_lea.vmem %s268, 64
        %v905 = vld [vmem:[%s904] sm:$0xf]
        %v906 = vsel %vm383, %v900, %v905
        %907 = vst [vmem:[%s904] sm:$0xf] %v906
        %v908 = vld [vmem:[%s904 + $0x4] sm:$0x1]
        %v909 = vsel %vm389, %v901, %v908
        %910 = vst [vmem:[%s904 + $0x4] sm:$0x1] %v909
      $region40: #{tpu_custom_call.1} parent=35 // pred_fallthru
        _
      %p911 = scmp.lt.s32.totalorder %s19, 1
      %s912 = scalar_select %p911, %s19, 1
      %p913 = scmp.lt.s32.totalorder %s20, 9
      %s914 = scalar_select %p913, %s20, 9
      %s915 = smul.addr %s914, 20
      %s916 = smul.addr %s912, 200
      %s917 = sadd.s32 %s915, %s916
      %s918 = smul.addr %s917, 4
      %s919 = scalar_lea.vmem %s4, %s918
      // Predicated region
      $region41: #{tpu_custom_call.1} parent=35 // pred_check
        %p920 = pneg %p148
      $region42: #{tpu_custom_call.1} parent=35 // pred_check_branch
        %922 = sbr.rel (%p920) target = $region44
      $region43: #{tpu_custom_call.1} parent=35 // pred_region
        _
      $region44: #{tpu_custom_call.1} parent=35 // pred_fallthru
        _
    $region36: #{tpu_custom_call.1} parent=5 // pred_fallthru
      _
    %p923 = scmp.le.s32.totalorder 2, %s10
    // Predicated region
    $region45: #{tpu_custom_call.1} parent=5 // pred_check
      %p924 = pneg %p923
    $region46: #{tpu_custom_call.1} parent=5 // pred_check_branch
      %926 = sbr.rel (%p924) target = $region48
    $region47: #{tpu_custom_call.1} parent=5 // pred_region
      %s927 = ssub.s32 %s10, 2
      // Predicated region
      $region49: #{tpu_custom_call.1} parent=47 // pred_check
        %p928 = pneg %p154
      $region50: #{tpu_custom_call.1} parent=47 // pred_check_branch
        %930 = sbr.rel (%p928) target = $region52
      $region51: #{tpu_custom_call.1} parent=47 // pred_region
        %p931 = scmp.lt.s32.totalorder %s21, 1
        %s932 = scalar_select %p931, %s21, 1
        %p933 = scmp.lt.s32.totalorder %s22, 9
        %s934 = scalar_select %p933, %s22, 9
        %s935 = smul.addr %s934, 20
        %s936 = smul.addr %s932, 200
        %s937 = sadd.s32 %s935, %s936
        %s938 = smul.addr %s937, 4
        %s939 = scalar_lea.vmem %s4, %s938
      $region52: #{tpu_custom_call.1} parent=47 // pred_fallthru
        _
    $region48: #{tpu_custom_call.1} parent=5 // pred_fallthru
      _
  $region6: #{tpu_custom_call.1} parent=0 // loop_footer
    %s14 = sadd.s32 1, %s10
  $region7: #{tpu_custom_call.1} parent=0 // loop_footer_branch
    %9 = sbr.rel target = $region3
  $region8: #{tpu_custom_call.1} parent=0 // loop_exit
    _

</llo_original>
